<compile_context>
chip_gen: v6e
topology: v6e:2x2x1
jax: 0.10.0
libtpu: 0.0.40
codegen_flags: <defaults>
</compile_context>

<pallas_src>
import functools
import math

import jax
import jax.numpy as jnp
from jax.experimental import pallas as pl
from jax.experimental.pallas import tpu as pltpu


def _layer_norm(x, gamma, beta, eps=1e-6):
    # NOTE: eps=1e-6 matches the common transformer/Layers.py LayerNorm config
    # (PyTorch nn.LayerNorm default would be 1e-5).
    mean = jnp.mean(x, axis=-1, keepdims=True)
    var = jnp.mean((x - mean) ** 2, axis=-1, keepdims=True)
    return (x - mean) * jax.lax.rsqrt(var + eps) * gamma + beta


def encoder_layer_kernel(
    q_ref, k_ref, v_ref, bias_ref, npmask_ref,
    wq_ref, bq_ref, wk_ref, bk_ref, wv_ref, bv_ref, wo_ref, bo_ref,
    ln1_g_ref, ln1_b_ref,
    w1_ref, b1_ref, w2_ref, b2_ref, ln2_g_ref, ln2_b_ref,
    out_ref, attn_ref,
    *, n_head, d_k, d_v,
):
    f32 = jnp.float32
    bf16 = jnp.bfloat16

    q_in = q_ref[0]                       # (tq, D)  f32
    k_in = k_ref[0]                       # (Lk, D)  bf16
    v_in = v_ref[0]                       # (Lk, D)  bf16
    bias = bias_ref[0].astype(f32)        # (tq, Lk) additive mask bias (0 / -1e9)
    npm = npmask_ref[0].astype(f32)       # (tq, 1)

    tq = q_in.shape[0]
    Lk = k_in.shape[0]
    H = n_head

    # ---- self-attention (pre-norm on the query path) ----
    residual = q_in
    qn = _layer_norm(q_in, ln1_g_ref[0], ln1_b_ref[0])

    # bf16 MXU operands, f32 accumulation; biases / LN params stay f32.
    Q = jnp.dot(qn.astype(bf16), wq_ref[...], preferred_element_type=f32) + bq_ref[0]
    K = jnp.dot(k_in, wk_ref[...], preferred_element_type=f32) + bk_ref[0]
    V = jnp.dot(v_in, wv_ref[...], preferred_element_type=f32) + bv_ref[0]

    # batched heads: (L, H*d) -> (H, L, d); cast to bf16 BEFORE the relayout so the
    # transposes move half the bytes.  Leading batch dims keep Mosaic's batched
    # dot_general lowering on the known-good path.
    Qh = jnp.transpose(Q.astype(bf16).reshape(tq, H, d_k), (1, 0, 2))   # (H, tq, dk)
    Kh = jnp.transpose(K.astype(bf16).reshape(Lk, H, d_k), (1, 0, 2))   # (H, Lk, dk)
    Vh = jnp.transpose(V.astype(bf16).reshape(Lk, H, d_v), (1, 0, 2))   # (H, Lk, dv)

    scale = 1.0 / math.sqrt(d_k)
    s = jnp.einsum('hqd,hkd->hqk', Qh, Kh,
                   preferred_element_type=f32) * scale                  # (H, tq, Lk)
    s = s + bias[None, :, :]

    # folded softmax: one f32 exp temp; exp kept in f32 (v5e has no bf16 EUP).
    p = jnp.exp(s - jnp.max(s, axis=-1, keepdims=True))
    attn = (p * pl.reciprocal(jnp.sum(p, axis=-1, keepdims=True),
                              approx=True)).astype(bf16)                # (H, tq, Lk)
    # store exactly the tensor used for the context matmul (bf16 output).
    attn_ref[0] = attn

    ctx = jnp.einsum('hqk,hkd->hqd', attn, Vh,
                     preferred_element_type=f32)                        # (H, tq, dv)
    concat = jnp.transpose(ctx, (1, 0, 2)).reshape(tq, H * d_v)         # (tq, H*dv)

    attn_out = jnp.dot(concat.astype(bf16), wo_ref[...],
                       preferred_element_type=f32) + bo_ref[0]
    attn_out = attn_out + residual                                      # dropout == identity

    # ---- position-wise FFN (pre-norm) ----
    res2 = attn_out
    xn = _layer_norm(attn_out, ln2_g_ref[0], ln2_b_ref[0])
    h1 = jnp.maximum(
        jnp.dot(xn.astype(bf16), w1_ref[...], preferred_element_type=f32) + b1_ref[0],
        0.0)
    h2 = jnp.dot(h1.astype(bf16), w2_ref[...], preferred_element_type=f32) + b2_ref[0]

    # ---- non-pad mask ----
    out_ref[0] = (h2 + res2) * npm


def _const_index(*args, nd):
    return (0,) * nd


def _vmem_capacity_bytes():
    """Per-core VMEM capacity; conservative 64 MiB fallback (v7x per-TC)."""
    try:
        info = pltpu.get_tpu_info()
        cap = getattr(info, "vmem_capacity_bytes", None)
        if cap:
            return int(cap)
    except Exception:
        pass
    return 64 * 2 ** 20


def _step_vmem_bytes(tq, Lk, D, H, d_k, d_v, d_inner, weight_bytes):
    """Rough per-grid-step VMEM footprint, including in-kernel intermediates."""
    blocks = 2 * (                       # double-buffered pipeline blocks
        tq * D * 4                       # q tile (f32)
        + 2 * Lk * D * 2                 # k, v full-length (bf16)
        + tq * Lk * 2                    # additive mask bias (bf16)
        + tq * 2                         # non-pad mask (bf16)
        + tq * D * 4                     # enc_output tile (f32)
        + H * tq * Lk * 2)               # attn tile (bf16)
    inter = (
        2 * H * tq * Lk * 4              # scores + exp (f32), worst-case live
        + H * tq * Lk * 2                # normalized attn (bf16)
        + (tq + 2 * Lk) * H * d_k * 4    # Q/K/V projections (f32)
        + (tq + 2 * Lk) * H * d_k * 2    # bf16 head-major copies
        + H * tq * d_v * 4               # ctx (f32)
        + tq * d_inner * 4               # FFN hidden (f32)
        + 3 * tq * D * 4)                # residuals / LN temps
    return blocks + 2 * weight_bytes + inter


def _choose_tq(Lq, fits):
    """Largest q-tile (multiple of 16, up to 512) dividing Lq that fits the budget."""
    divisors = [t for t in (512, 384, 256, 192, 128, 64, 32, 16) if Lq % t == 0]
    if not divisors:
        return Lq
    for t in divisors:                   # largest first
        if fits(t):
            return t
    return divisors[-1]                  # nothing fits: take the smallest tile


def encoder_layer(q, k, v, slf_attn_mask, non_pad_mask, params,
                  *, n_head, d_k, d_v):
    B, Lq, D = q.shape
    Lk = k.shape[1]
    H = n_head

    (wq, bq, wk, bk, wv, bv, wo, bo,
     ln1_g, ln1_b, w1, b1, w2, b2, ln2_g, ln2_b) = params
    d_inner = w1.shape[1]

    bf16 = jnp.bfloat16
    # bf16 weight storage: half the DMA/VMEM bytes, native MXU dtype.
    wq, wk, wv, wo, w1, w2 = (x.astype(bf16) for x in (wq, wk, wv, wo, w1, w2))
    # K/V are only consumed by bf16 MXU projections -> wrapper cast is lossless w.r.t.
    # the previous kernel and halves their DMA stream. Q stays f32 (residual path).
    k_in = k.astype(bf16)
    v_in = v.astype(bf16)
    # Precomputed additive mask bias (nonzero = attend) and compact non-pad mask.
    mask_bias = jnp.where(slf_attn_mask > 0, 0.0, -1e9).astype(bf16)
    npm_in = non_pad_mask.astype(bf16)

    weights = (wq, bq, wk, bk, wv, bv, wo, bo,
               ln1_g, ln1_b, w1, b1, w2, b2, ln2_g, ln2_b)
    weight_bytes = sum(int(w.size) * w.dtype.itemsize for w in weights)

    # ---- VMEM-aware q-tile selection (hardware-derived capacity) ----
    vmem_cap = _vmem_capacity_bytes()
    budget = int(0.70 * vmem_cap)
    step_bytes = functools.partial(_step_vmem_bytes, Lk=Lk, D=D, H=H,
                                   d_k=d_k, d_v=d_v, d_inner=d_inner,
                                   weight_bytes=weight_bytes)
    tq = _choose_tq(Lq, lambda t: step_bytes(t) <= budget)
    n_q = Lq // tq

    vmem_limit = int(min(0.9 * vmem_cap,
                         max(32 * 2 ** 20, 2 * step_bytes(tq))))

    in_specs = [
        pl.BlockSpec((1, tq, D), lambda b, qi: (b, qi, 0)),    # q (tiled over Lq)
        pl.BlockSpec((1, Lk, D), lambda b, qi: (b, 0, 0)),     # k (full length, bf16)
        pl.BlockSpec((1, Lk, D), lambda b, qi: (b, 0, 0)),     # v (full length, bf16)
        pl.BlockSpec((1, tq, Lk), lambda b, qi: (b, qi, 0)),   # additive mask bias
        pl.BlockSpec((1, tq, 1), lambda b, qi: (b, qi, 0)),    # non_pad_mask
    ] + [
        pl.BlockSpec(w.shape, functools.partial(_const_index, nd=w.ndim))
        for w in weights
    ]
    out_specs = [
        pl.BlockSpec((1, tq, D), lambda b, qi: (b, qi, 0)),          # enc_output
        pl.BlockSpec((1, H, tq, Lk), lambda b, qi: (b, 0, qi, 0)),   # enc_slf_attn (bf16)
    ]
    out_shapes = (
        jax.ShapeDtypeStruct((B, Lq, D), jnp.float32),
        jax.ShapeDtypeStruct((B, H, Lq, Lk), jnp.bfloat16),
    )

    # ---- advisory cost estimate ----
    flops = 2 * B * (
        Lq * D * H * d_k + Lk * D * H * d_k + Lk * D * H * d_v
        + H * Lq * Lk * d_k + H * Lq * Lk * d_v
        + Lq * H * d_v * D + Lq * D * d_inner + Lq * d_inner * d_v)
    transcendentals = B * H * Lq * Lk
    bytes_accessed = int(
        q.size * 4 + (k_in.size + v_in.size) * 2
        + mask_bias.size * 2 + npm_in.size * 2
        + weight_bytes
        + B * Lq * D * 4 + B * H * Lq * Lk * 2)
    cost = pl.CostEstimate(flops=int(flops),
                           transcendentals=int(transcendentals),
                           bytes_accessed=bytes_accessed)

    kernel = functools.partial(encoder_layer_kernel,
                               n_head=n_head, d_k=d_k, d_v=d_v)

    enc_output, enc_slf_attn = pl.pallas_call(
        kernel,
        out_shape=out_shapes,
        grid_spec=pltpu.PrefetchScalarGridSpec(
            num_scalar_prefetch=0,
            grid=(B, n_q),
            in_specs=in_specs,
            out_specs=out_specs,
        ),
        compiler_params=pltpu.CompilerParams(
            dimension_semantics=("parallel", "parallel"),
            vmem_limit_bytes=vmem_limit),
        cost_estimate=cost,
    )(q, k_in, v_in, mask_bias, npm_in, *weights)

    # TODO(synk): dynamic_v_attention auxiliary loss definition unavailable; return 0.
    loss = jnp.zeros((), jnp.float32)
    return enc_output, enc_slf_attn, loss


def init_params(key, d_model, d_inner, n_head, d_k, d_v):
    keys = jax.random.split(key, 8)
    scale = 0.05
    wq = scale * jax.random.normal(keys[0], (d_model, n_head * d_k), jnp.float32)
    wk = scale * jax.random.normal(keys[1], (d_model, n_head * d_k), jnp.float32)
    wv = scale * jax.random.normal(keys[2], (d_model, n_head * d_v), jnp.float32)
    wo = scale * jax.random.normal(keys[3], (n_head * d_v, d_model), jnp.float32)
    w1 = scale * jax.random.normal(keys[4], (d_v, d_inner), jnp.float32)
    w2 = scale * jax.random.normal(keys[5], (d_inner, d_v), jnp.float32)
    bq = jnp.zeros((1, n_head * d_k), jnp.float32)
    bk = jnp.zeros((1, n_head * d_k), jnp.float32)
    bv = jnp.zeros((1, n_head * d_v), jnp.float32)
    bo = jnp.zeros((1, d_model), jnp.float32)
    b1 = jnp.zeros((1, d_inner), jnp.float32)
    b2 = jnp.zeros((1, d_v), jnp.float32)
    ln1_g = jnp.ones((1, d_model), jnp.float32)
    ln1_b = jnp.zeros((1, d_model), jnp.float32)
    ln2_g = jnp.ones((1, d_v), jnp.float32)
    ln2_b = jnp.zeros((1, d_v), jnp.float32)
    return (wq, bq, wk, bk, wv, bv, wo, bo,
            ln1_g, ln1_b, w1, b1, w2, b2, ln2_g, ln2_b)


if __name__ == "__main__":
    # Small shapes: d_v == d_model so residual / FFN dims line up (as required by
    # the PyTorch module's usage: PositionwiseFeedForward(d_v, d_inner)).
    B, L = 2, 8
    d_model, d_inner, n_head, d_k, d_v = 32, 64, 2, 16, 32

    key = jax.random.PRNGKey(0)
    k_in, k_par = jax.random.split(key)
    kq, kk, kv = jax.random.split(k_in, 3)

    enc_q = jax.random.normal(kq, (B, L, d_model), jnp.float32)
    enc_k = jax.random.normal(kk, (B, L, d_model), jnp.float32)
    enc_v = jax.random.normal(kv, (B, L, d_model), jnp.float32)
    slf_attn_mask = jnp.ones((B, L, L), jnp.float32)      # nonzero = attend
    non_pad_mask = jnp.ones((B, L, 1), jnp.float32)

    params = init_params(k_par, d_model, d_inner, n_head, d_k, d_v)

    enc_out, enc_attn, loss = encoder_layer(
        enc_q, enc_k, enc_v, slf_attn_mask, non_pad_mask, params,
        n_head=n_head, d_k=d_k, d_v=d_v)

    jax.block_until_ready((enc_out, enc_attn, loss))
    assert enc_out.shape == (B, L, d_model)
    assert enc_attn.shape == (B, n_head, L, L)
    assert bool(jnp.all(jnp.isfinite(enc_out)))
    assert bool(jnp.all(jnp.isfinite(enc_attn.astype(jnp.float32))))
    print("KERNEL_OK")
</pallas_src>

<mosaic_0001>
module attributes {stable_mosaic.version = 11 : i64} {
  func.func @encoder_layer_kernel(%arg0: i32, %arg1: i32, %arg2: memref<1x8x32xf32, #tpu.memory_space<vmem>>, %arg3: memref<1x8x32xbf16, #tpu.memory_space<vmem>>, %arg4: memref<1x8x32xbf16, #tpu.memory_space<vmem>>, %arg5: memref<1x8x8xbf16, #tpu.memory_space<vmem>>, %arg6: memref<1x8x1xbf16, #tpu.memory_space<vmem>>, %arg7: memref<32x32xbf16, #tpu.memory_space<vmem>>, %arg8: memref<1x32xf32, #tpu.memory_space<vmem>>, %arg9: memref<32x32xbf16, #tpu.memory_space<vmem>>, %arg10: memref<1x32xf32, #tpu.memory_space<vmem>>, %arg11: memref<32x64xbf16, #tpu.memory_space<vmem>>, %arg12: memref<1x64xf32, #tpu.memory_space<vmem>>, %arg13: memref<64x32xbf16, #tpu.memory_space<vmem>>, %arg14: memref<1x32xf32, #tpu.memory_space<vmem>>, %arg15: memref<1x32xf32, #tpu.memory_space<vmem>>, %arg16: memref<1x32xf32, #tpu.memory_space<vmem>>, %arg17: memref<32x64xbf16, #tpu.memory_space<vmem>>, %arg18: memref<1x64xf32, #tpu.memory_space<vmem>>, %arg19: memref<64x32xbf16, #tpu.memory_space<vmem>>, %arg20: memref<1x32xf32, #tpu.memory_space<vmem>>, %arg21: memref<1x32xf32, #tpu.memory_space<vmem>>, %arg22: memref<1x32xf32, #tpu.memory_space<vmem>>, %arg23: memref<1x8x32xf32, #tpu.memory_space<vmem>>, %arg24: memref<1x2x8x8xbf16, #tpu.memory_space<vmem>>) attributes {dimension_semantics = [#tpu.dimension_semantics<parallel>, #tpu.dimension_semantics<parallel>], iteration_bounds = array<i64: 2, 1>, scalar_prefetch = 0 : i64, scratch_operands = 0 : i64, tpu.core_type = #tpu.core_type<tc>, window_params = [{transform_indices = @transform_0, window_bounds = array<i64: 1, 8, 32>}, {transform_indices = @transform_1, window_bounds = array<i64: 1, 8, 32>}, {transform_indices = @transform_2, window_bounds = array<i64: 1, 8, 32>}, {transform_indices = @transform_3, window_bounds = array<i64: 1, 8, 8>}, {transform_indices = @transform_4, window_bounds = array<i64: 1, 8, 1>}, {pipeline_mode = #tpu.pipeline_mode<synchronous>, transform_indices = @transform_5, window_bounds = array<i64: 32, 32>}, {pipeline_mode = #tpu.pipeline_mode<synchronous>, transform_indices = @transform_6, window_bounds = array<i64: 1, 32>}, {pipeline_mode = #tpu.pipeline_mode<synchronous>, transform_indices = @transform_7, window_bounds = array<i64: 32, 32>}, {pipeline_mode = #tpu.pipeline_mode<synchronous>, transform_indices = @transform_8, window_bounds = array<i64: 1, 32>}, {pipeline_mode = #tpu.pipeline_mode<synchronous>, transform_indices = @transform_9, window_bounds = array<i64: 32, 64>}, {pipeline_mode = #tpu.pipeline_mode<synchronous>, transform_indices = @transform_10, window_bounds = array<i64: 1, 64>}, {pipeline_mode = #tpu.pipeline_mode<synchronous>, transform_indices = @transform_11, window_bounds = array<i64: 64, 32>}, {pipeline_mode = #tpu.pipeline_mode<synchronous>, transform_indices = @transform_12, window_bounds = array<i64: 1, 32>}, {pipeline_mode = #tpu.pipeline_mode<synchronous>, transform_indices = @transform_13, window_bounds = array<i64: 1, 32>}, {pipeline_mode = #tpu.pipeline_mode<synchronous>, transform_indices = @transform_14, window_bounds = array<i64: 1, 32>}, {pipeline_mode = #tpu.pipeline_mode<synchronous>, transform_indices = @transform_15, window_bounds = array<i64: 32, 64>}, {pipeline_mode = #tpu.pipeline_mode<synchronous>, transform_indices = @transform_16, window_bounds = array<i64: 1, 64>}, {pipeline_mode = #tpu.pipeline_mode<synchronous>, transform_indices = @transform_17, window_bounds = array<i64: 64, 32>}, {pipeline_mode = #tpu.pipeline_mode<synchronous>, transform_indices = @transform_18, window_bounds = array<i64: 1, 32>}, {pipeline_mode = #tpu.pipeline_mode<synchronous>, transform_indices = @transform_19, window_bounds = array<i64: 1, 32>}, {pipeline_mode = #tpu.pipeline_mode<synchronous>, transform_indices = @transform_20, window_bounds = array<i64: 1, 32>}, {transform_indices = @transform_21, window_bounds = array<i64: 1, 8, 32>}, {transform_indices = @transform_22, window_bounds = array<i64: 1, 2, 8, 8>}]} {
    %c0 = arith.constant 0 : index
    %c0_0 = arith.constant 0 : index
    %c0_1 = arith.constant 0 : index
    %0 = vector.load %arg2[%c0, %c0_0, %c0_1] : memref<1x8x32xf32, #tpu.memory_space<vmem>>, vector<1x8x32xf32>
    %1 = vector.shape_cast %0 : vector<1x8x32xf32> to vector<8x32xf32>
    %c0_2 = arith.constant 0 : index
    %c0_3 = arith.constant 0 : index
    %c0_4 = arith.constant 0 : index
    %2 = vector.load %arg3[%c0_2, %c0_3, %c0_4] : memref<1x8x32xbf16, #tpu.memory_space<vmem>>, vector<1x8x32xbf16>
    %3 = vector.shape_cast %2 : vector<1x8x32xbf16> to vector<8x32xbf16>
    %c0_5 = arith.constant 0 : index
    %c0_6 = arith.constant 0 : index
    %c0_7 = arith.constant 0 : index
    %4 = vector.load %arg4[%c0_5, %c0_6, %c0_7] : memref<1x8x32xbf16, #tpu.memory_space<vmem>>, vector<1x8x32xbf16>
    %5 = vector.shape_cast %4 : vector<1x8x32xbf16> to vector<8x32xbf16>
    %c0_8 = arith.constant 0 : index
    %c0_9 = arith.constant 0 : index
    %c0_10 = arith.constant 0 : index
    %6 = vector.load %arg5[%c0_8, %c0_9, %c0_10] : memref<1x8x8xbf16, #tpu.memory_space<vmem>>, vector<1x8x8xbf16>
    %7 = vector.shape_cast %6 : vector<1x8x8xbf16> to vector<8x8xbf16>
    %8 = arith.extf %7 : vector<8x8xbf16> to vector<8x8xf32>
    %c0_11 = arith.constant 0 : index
    %c0_12 = arith.constant 0 : index
    %c0_13 = arith.constant 0 : index
    %9 = vector.load %arg6[%c0_11, %c0_12, %c0_13] : memref<1x8x1xbf16, #tpu.memory_space<vmem>>, vector<1x8x1xbf16>
    %10 = vector.shape_cast %9 : vector<1x8x1xbf16> to vector<8x1xbf16>
    %11 = arith.extf %10 : vector<8x1xbf16> to vector<8x1xf32>
    %c0_14 = arith.constant 0 : index
    %c0_15 = arith.constant 0 : index
    %12 = vector.load %arg15[%c0_14, %c0_15] : memref<1x32xf32, #tpu.memory_space<vmem>>, vector<1x32xf32>
    %13 = vector.shape_cast %12 : vector<1x32xf32> to vector<32xf32>
    %c0_16 = arith.constant 0 : index
    %c0_17 = arith.constant 0 : index
    %14 = vector.load %arg16[%c0_16, %c0_17] : memref<1x32xf32, #tpu.memory_space<vmem>>, vector<1x32xf32>
    %15 = vector.shape_cast %14 : vector<1x32xf32> to vector<32xf32>
    %cst = arith.constant dense<0.000000e+00> : vector<8xf32>
    %16 = vector.multi_reduction <add>, %1, %cst [1] : vector<8x32xf32> to vector<8xf32>
    %17 = vector.shape_cast %16 : vector<8xf32> to vector<8x1xf32>
    %cst_18 = arith.constant 3.200000e+01 : f32
    %18 = vector.broadcast %cst_18 : f32 to vector<8x1xf32>
    %19 = arith.divf %17, %18 : vector<8x1xf32>
    %20 = vector.broadcast %19 : vector<8x1xf32> to vector<8x32xf32>
    %21 = arith.subf %1, %20 : vector<8x32xf32>
    %22 = arith.mulf %21, %21 : vector<8x32xf32>
    %cst_19 = arith.constant dense<0.000000e+00> : vector<8xf32>
    %23 = vector.multi_reduction <add>, %22, %cst_19 [1] : vector<8x32xf32> to vector<8xf32>
    %24 = vector.shape_cast %23 : vector<8xf32> to vector<8x1xf32>
    %cst_20 = arith.constant 3.200000e+01 : f32
    %25 = vector.broadcast %cst_20 : f32 to vector<8x1xf32>
    %26 = arith.divf %24, %25 : vector<8x1xf32>
    %27 = vector.broadcast %19 : vector<8x1xf32> to vector<8x32xf32>
    %28 = arith.subf %1, %27 : vector<8x32xf32>
    %cst_21 = arith.constant 9.99999997E-7 : f32
    %29 = vector.broadcast %cst_21 : f32 to vector<8x1xf32>
    %30 = arith.addf %26, %29 : vector<8x1xf32>
    %31 = math.rsqrt %30 : vector<8x1xf32>
    %32 = vector.broadcast %31 : vector<8x1xf32> to vector<8x32xf32>
    %33 = arith.mulf %28, %32 : vector<8x32xf32>
    %34 = vector.shape_cast %13 : vector<32xf32> to vector<1x32xf32>
    %35 = vector.broadcast %34 : vector<1x32xf32> to vector<8x32xf32>
    %36 = arith.mulf %33, %35 : vector<8x32xf32>
    %37 = vector.shape_cast %15 : vector<32xf32> to vector<1x32xf32>
    %38 = vector.broadcast %37 : vector<1x32xf32> to vector<8x32xf32>
    %39 = arith.addf %36, %38 : vector<8x32xf32>
    %40 = arith.truncf %39 : vector<8x32xf32> to vector<8x32xbf16>
    %c0_22 = arith.constant 0 : index
    %c0_23 = arith.constant 0 : index
    %41 = vector.load %arg7[%c0_22, %c0_23] : memref<32x32xbf16, #tpu.memory_space<vmem>>, vector<32x32xbf16>
    %cst_24 = arith.constant dense<0.000000e+00> : vector<8x32xf32>
    %42 = tpu.matmul %40, %41, %cst_24 {dimension_numbers = #tpu.dot_dimension_numbers<[1], [0], [0], [1], [0, 0, 1, 1], [], []>} : vector<8x32xbf16>, vector<32x32xbf16>, vector<8x32xf32> -> vector<8x32xf32>
    %c0_25 = arith.constant 0 : index
    %c0_26 = arith.constant 0 : index
    %43 = vector.load %arg8[%c0_25, %c0_26] : memref<1x32xf32, #tpu.memory_space<vmem>>, vector<1x32xf32>
    %44 = vector.shape_cast %43 : vector<1x32xf32> to vector<32xf32>
    %45 = vector.shape_cast %44 : vector<32xf32> to vector<1x32xf32>
    %46 = vector.broadcast %45 : vector<1x32xf32> to vector<8x32xf32>
    %47 = arith.addf %42, %46 : vector<8x32xf32>
    %c0_27 = arith.constant 0 : index
    %c0_28 = arith.constant 0 : index
    %48 = vector.load %arg9[%c0_27, %c0_28] : memref<32x32xbf16, #tpu.memory_space<vmem>>, vector<32x32xbf16>
    %cst_29 = arith.constant dense<0.000000e+00> : vector<8x32xf32>
    %49 = tpu.matmul %3, %48, %cst_29 {dimension_numbers = #tpu.dot_dimension_numbers<[1], [0], [0], [1], [0, 0, 1, 1], [], []>} : vector<8x32xbf16>, vector<32x32xbf16>, vector<8x32xf32> -> vector<8x32xf32>
    %c0_30 = arith.constant 0 : index
    %c0_31 = arith.constant 0 : index
    %50 = vector.load %arg10[%c0_30, %c0_31] : memref<1x32xf32, #tpu.memory_space<vmem>>, vector<1x32xf32>
    %51 = vector.shape_cast %50 : vector<1x32xf32> to vector<32xf32>
    %52 = vector.shape_cast %51 : vector<32xf32> to vector<1x32xf32>
    %53 = vector.broadcast %52 : vector<1x32xf32> to vector<8x32xf32>
    %54 = arith.addf %49, %53 : vector<8x32xf32>
    %c0_32 = arith.constant 0 : index
    %c0_33 = arith.constant 0 : index
    %55 = vector.load %arg11[%c0_32, %c0_33] : memref<32x64xbf16, #tpu.memory_space<vmem>>, vector<32x64xbf16>
    %cst_34 = arith.constant dense<0.000000e+00> : vector<8x64xf32>
    %56 = tpu.matmul %5, %55, %cst_34 {dimension_numbers = #tpu.dot_dimension_numbers<[1], [0], [0], [1], [0, 0, 1, 1], [], []>} : vector<8x32xbf16>, vector<32x64xbf16>, vector<8x64xf32> -> vector<8x64xf32>
    %c0_35 = arith.constant 0 : index
    %c0_36 = arith.constant 0 : index
    %57 = vector.load %arg12[%c0_35, %c0_36] : memref<1x64xf32, #tpu.memory_space<vmem>>, vector<1x64xf32>
    %58 = vector.shape_cast %57 : vector<1x64xf32> to vector<64xf32>
    %59 = vector.shape_cast %58 : vector<64xf32> to vector<1x64xf32>
    %60 = vector.broadcast %59 : vector<1x64xf32> to vector<8x64xf32>
    %61 = arith.addf %56, %60 : vector<8x64xf32>
    %62 = arith.truncf %47 : vector<8x32xf32> to vector<8x32xbf16>
    %63 = vector.shape_cast %62 : vector<8x32xbf16> to vector<8x2x16xbf16>
    %64 = tpu.transpose %63, [1, 0, 2] : vector<8x2x16xbf16> -> vector<2x8x16xbf16>
    %65 = arith.truncf %54 : vector<8x32xf32> to vector<8x32xbf16>
    %66 = vector.shape_cast %65 : vector<8x32xbf16> to vector<8x2x16xbf16>
    %67 = tpu.transpose %66, [1, 0, 2] : vector<8x2x16xbf16> -> vector<2x8x16xbf16>
    %68 = arith.truncf %61 : vector<8x64xf32> to vector<8x64xbf16>
    %69 = vector.shape_cast %68 : vector<8x64xbf16> to vector<8x2x32xbf16>
    %70 = tpu.transpose %69, [1, 0, 2] : vector<8x2x32xbf16> -> vector<2x8x32xbf16>
    "tpu.trace_start"() <{level = 10 : i32, message = "hqd,hkd->hqk"}> : () -> ()
    %cst_37 = arith.constant dense<0.000000e+00> : vector<2x8x8xf32>
    %71 = tpu.matmul %64, %67, %cst_37 {dimension_numbers = #tpu.dot_dimension_numbers<[2], [2], [1], [1], [0, 0, 0, 1, 1, 1], [0], [0]>} : vector<2x8x16xbf16>, vector<2x8x16xbf16>, vector<2x8x8xf32> -> vector<2x8x8xf32>
    "tpu.trace_stop"() : () -> ()
    %cst_38 = arith.constant 2.500000e-01 : f32
    %72 = vector.broadcast %cst_38 : f32 to vector<2x8x8xf32>
    %73 = arith.mulf %71, %72 : vector<2x8x8xf32>
    %74 = vector.shape_cast %8 : vector<8x8xf32> to vector<1x8x8xf32>
    %75 = vector.broadcast %74 : vector<1x8x8xf32> to vector<2x8x8xf32>
    %76 = arith.addf %73, %75 : vector<2x8x8xf32>
    %cst_39 = arith.constant dense<0xFF800000> : vector<2x8xf32>
    %77 = vector.multi_reduction <maximumf>, %76, %cst_39 [2] : vector<2x8x8xf32> to vector<2x8xf32>
    %78 = vector.shape_cast %77 : vector<2x8xf32> to vector<2x8x1xf32>
    %79 = vector.broadcast %78 : vector<2x8x1xf32> to vector<2x8x8xf32>
    %80 = arith.subf %76, %79 : vector<2x8x8xf32>
    %81 = math.exp %80 : vector<2x8x8xf32>
    %cst_40 = arith.constant dense<0.000000e+00> : vector<2x8xf32>
    %82 = vector.multi_reduction <add>, %81, %cst_40 [2] : vector<2x8x8xf32> to vector<2x8xf32>
    %83 = vector.shape_cast %82 : vector<2x8xf32> to vector<2x8x1xf32>
    %84 = tpu.reciprocal %83 {approx = true} : vector<2x8x1xf32> -> vector<2x8x1xf32>
    %85 = vector.broadcast %84 : vector<2x8x1xf32> to vector<2x8x8xf32>
    %86 = arith.mulf %81, %85 : vector<2x8x8xf32>
    %87 = arith.truncf %86 : vector<2x8x8xf32> to vector<2x8x8xbf16>
    %c0_41 = arith.constant 0 : index
    %c0_42 = arith.constant 0 : index
    %c0_43 = arith.constant 0 : index
    %c0_44 = arith.constant 0 : index
    %88 = vector.load %arg24[%c0_41, %c0_42, %c0_43, %c0_44] : memref<1x2x8x8xbf16, #tpu.memory_space<vmem>>, vector<1x2x8x8xbf16>
    %89 = vector.shape_cast %88 : vector<1x2x8x8xbf16> to vector<2x8x8xbf16>
    %90 = vector.shape_cast %87 : vector<2x8x8xbf16> to vector<1x2x8x8xbf16>
    tpu.vector_store %arg24[%c0_41, %c0_42, %c0_43, %c0_44], %90 {strides = array<i32>} : memref<1x2x8x8xbf16, #tpu.memory_space<vmem>>, vector<1x2x8x8xbf16>,
    "tpu.trace_start"() <{level = 10 : i32, message = "hqk,hkd->hqd"}> : () -> ()
    %cst_45 = arith.constant dense<0.000000e+00> : vector<2x8x32xf32>
    %91 = tpu.matmul %87, %70, %cst_45 {dimension_numbers = #tpu.dot_dimension_numbers<[2], [1], [1], [2], [0, 0, 0, 1, 1, 2], [0], [0]>} : vector<2x8x8xbf16>, vector<2x8x32xbf16>, vector<2x8x32xf32> -> vector<2x8x32xf32>
    "tpu.trace_stop"() : () -> ()
    %92 = tpu.transpose %91, [1, 0, 2] : vector<2x8x32xf32> -> vector<8x2x32xf32>
    %93 = vector.shape_cast %92 : vector<8x2x32xf32> to vector<8x64xf32>
    %94 = arith.truncf %93 : vector<8x64xf32> to vector<8x64xbf16>
    %c0_46 = arith.constant 0 : index
    %c0_47 = arith.constant 0 : index
    %95 = vector.load %arg13[%c0_46, %c0_47] : memref<64x32xbf16, #tpu.memory_space<vmem>>, vector<64x32xbf16>
    %cst_48 = arith.constant dense<0.000000e+00> : vector<8x32xf32>
    %96 = tpu.matmul %94, %95, %cst_48 {dimension_numbers = #tpu.dot_dimension_numbers<[1], [0], [0], [1], [0, 0, 1, 1], [], []>} : vector<8x64xbf16>, vector<64x32xbf16>, vector<8x32xf32> -> vector<8x32xf32>
    %c0_49 = arith.constant 0 : index
    %c0_50 = arith.constant 0 : index
    %97 = vector.load %arg14[%c0_49, %c0_50] : memref<1x32xf32, #tpu.memory_space<vmem>>, vector<1x32xf32>
    %98 = vector.shape_cast %97 : vector<1x32xf32> to vector<32xf32>
    %99 = vector.shape_cast %98 : vector<32xf32> to vector<1x32xf32>
    %100 = vector.broadcast %99 : vector<1x32xf32> to vector<8x32xf32>
    %101 = arith.addf %96, %100 : vector<8x32xf32>
    %102 = arith.addf %101, %1 : vector<8x32xf32>
    %c0_51 = arith.constant 0 : index
    %c0_52 = arith.constant 0 : index
    %103 = vector.load %arg21[%c0_51, %c0_52] : memref<1x32xf32, #tpu.memory_space<vmem>>, vector<1x32xf32>
    %104 = vector.shape_cast %103 : vector<1x32xf32> to vector<32xf32>
    %c0_53 = arith.constant 0 : index
    %c0_54 = arith.constant 0 : index
    %105 = vector.load %arg22[%c0_53, %c0_54] : memref<1x32xf32, #tpu.memory_space<vmem>>, vector<1x32xf32>
    %106 = vector.shape_cast %105 : vector<1x32xf32> to vector<32xf32>
    %cst_55 = arith.constant dense<0.000000e+00> : vector<8xf32>
    %107 = vector.multi_reduction <add>, %102, %cst_55 [1] : vector<8x32xf32> to vector<8xf32>
    %108 = vector.shape_cast %107 : vector<8xf32> to vector<8x1xf32>
    %cst_56 = arith.constant 3.200000e+01 : f32
    %109 = vector.broadcast %cst_56 : f32 to vector<8x1xf32>
    %110 = arith.divf %108, %109 : vector<8x1xf32>
    %111 = vector.broadcast %110 : vector<8x1xf32> to vector<8x32xf32>
    %112 = arith.subf %102, %111 : vector<8x32xf32>
    %113 = arith.mulf %112, %112 : vector<8x32xf32>
    %cst_57 = arith.constant dense<0.000000e+00> : vector<8xf32>
    %114 = vector.multi_reduction <add>, %113, %cst_57 [1] : vector<8x32xf32> to vector<8xf32>
    %115 = vector.shape_cast %114 : vector<8xf32> to vector<8x1xf32>
    %cst_58 = arith.constant 3.200000e+01 : f32
    %116 = vector.broadcast %cst_58 : f32 to vector<8x1xf32>
    %117 = arith.divf %115, %116 : vector<8x1xf32>
    %118 = vector.broadcast %110 : vector<8x1xf32> to vector<8x32xf32>
    %119 = arith.subf %102, %118 : vector<8x32xf32>
    %cst_59 = arith.constant 9.99999997E-7 : f32
    %120 = vector.broadcast %cst_59 : f32 to vector<8x1xf32>
    %121 = arith.addf %117, %120 : vector<8x1xf32>
    %122 = math.rsqrt %121 : vector<8x1xf32>
    %123 = vector.broadcast %122 : vector<8x1xf32> to vector<8x32xf32>
    %124 = arith.mulf %119, %123 : vector<8x32xf32>
    %125 = vector.shape_cast %104 : vector<32xf32> to vector<1x32xf32>
    %126 = vector.broadcast %125 : vector<1x32xf32> to vector<8x32xf32>
    %127 = arith.mulf %124, %126 : vector<8x32xf32>
    %128 = vector.shape_cast %106 : vector<32xf32> to vector<1x32xf32>
    %129 = vector.broadcast %128 : vector<1x32xf32> to vector<8x32xf32>
    %130 = arith.addf %127, %129 : vector<8x32xf32>
    %131 = arith.truncf %130 : vector<8x32xf32> to vector<8x32xbf16>
    %c0_60 = arith.constant 0 : index
    %c0_61 = arith.constant 0 : index
    %132 = vector.load %arg17[%c0_60, %c0_61] : memref<32x64xbf16, #tpu.memory_space<vmem>>, vector<32x64xbf16>
    %cst_62 = arith.constant dense<0.000000e+00> : vector<8x64xf32>
    %133 = tpu.matmul %131, %132, %cst_62 {dimension_numbers = #tpu.dot_dimension_numbers<[1], [0], [0], [1], [0, 0, 1, 1], [], []>} : vector<8x32xbf16>, vector<32x64xbf16>, vector<8x64xf32> -> vector<8x64xf32>
    %c0_63 = arith.constant 0 : index
    %c0_64 = arith.constant 0 : index
    %134 = vector.load %arg18[%c0_63, %c0_64] : memref<1x64xf32, #tpu.memory_space<vmem>>, vector<1x64xf32>
    %135 = vector.shape_cast %134 : vector<1x64xf32> to vector<64xf32>
    %136 = vector.shape_cast %135 : vector<64xf32> to vector<1x64xf32>
    %137 = vector.broadcast %136 : vector<1x64xf32> to vector<8x64xf32>
    %138 = arith.addf %133, %137 : vector<8x64xf32>
    %cst_65 = arith.constant 0.000000e+00 : f32
    %139 = vector.broadcast %cst_65 : f32 to vector<8x64xf32>
    %140 = arith.maximumf %138, %139 : vector<8x64xf32>
    %141 = arith.truncf %140 : vector<8x64xf32> to vector<8x64xbf16>
    %c0_66 = arith.constant 0 : index
    %c0_67 = arith.constant 0 : index
    %142 = vector.load %arg19[%c0_66, %c0_67] : memref<64x32xbf16, #tpu.memory_space<vmem>>, vector<64x32xbf16>
    %cst_68 = arith.constant dense<0.000000e+00> : vector<8x32xf32>
    %143 = tpu.matmul %141, %142, %cst_68 {dimension_numbers = #tpu.dot_dimension_numbers<[1], [0], [0], [1], [0, 0, 1, 1], [], []>} : vector<8x64xbf16>, vector<64x32xbf16>, vector<8x32xf32> -> vector<8x32xf32>
    %c0_69 = arith.constant 0 : index
    %c0_70 = arith.constant 0 : index
    %144 = vector.load %arg20[%c0_69, %c0_70] : memref<1x32xf32, #tpu.memory_space<vmem>>, vector<1x32xf32>
    %145 = vector.shape_cast %144 : vector<1x32xf32> to vector<32xf32>
    %146 = vector.shape_cast %145 : vector<32xf32> to vector<1x32xf32>
    %147 = vector.broadcast %146 : vector<1x32xf32> to vector<8x32xf32>
    %148 = arith.addf %143, %147 : vector<8x32xf32>
    %149 = arith.addf %148, %102 : vector<8x32xf32>
    %150 = vector.broadcast %11 : vector<8x1xf32> to vector<8x32xf32>
    %151 = arith.mulf %149, %150 : vector<8x32xf32>
    %c0_71 = arith.constant 0 : index
    %c0_72 = arith.constant 0 : index
    %c0_73 = arith.constant 0 : index
    %152 = vector.load %arg23[%c0_71, %c0_72, %c0_73] : memref<1x8x32xf32, #tpu.memory_space<vmem>>, vector<1x8x32xf32>
    %153 = vector.shape_cast %152 : vector<1x8x32xf32> to vector<8x32xf32>
    %154 = vector.shape_cast %151 : vector<8x32xf32> to vector<1x8x32xf32>
    tpu.vector_store %arg23[%c0_71, %c0_72, %c0_73], %154 {strides = array<i32>} : memref<1x8x32xf32, #tpu.memory_space<vmem>>, vector<1x8x32xf32>,
    return
  }
  func.func @transform_0(%arg0: i32, %arg1: i32) -> (i32, i32, i32) {
    %c0_i32 = arith.constant 0 : i32
    %c0_i32_0 = arith.constant 0 : i32
    return %arg0, %arg1, %c0_i32 : i32, i32, i32
  }
  func.func @transform_1(%arg0: i32, %arg1: i32) -> (i32, i32, i32) {
    %c0_i32 = arith.constant 0 : i32
    %c0_i32_0 = arith.constant 0 : i32
    %c0_i32_1 = arith.constant 0 : i32
    return %arg0, %c0_i32, %c0_i32_0 : i32, i32, i32
  }
  func.func @transform_2(%arg0: i32, %arg1: i32) -> (i32, i32, i32) {
    %c0_i32 = arith.constant 0 : i32
    %c0_i32_0 = arith.constant 0 : i32
    %c0_i32_1 = arith.constant 0 : i32
    return %arg0, %c0_i32, %c0_i32_0 : i32, i32, i32
  }
  func.func @transform_3(%arg0: i32, %arg1: i32) -> (i32, i32, i32) {
    %c0_i32 = arith.constant 0 : i32
    %c0_i32_0 = arith.constant 0 : i32
    return %arg0, %arg1, %c0_i32 : i32, i32, i32
  }
  func.func @transform_4(%arg0: i32, %arg1: i32) -> (i32, i32, i32) {
    %c0_i32 = arith.constant 0 : i32
    %c0_i32_0 = arith.constant 0 : i32
    return %arg0, %arg1, %c0_i32 : i32, i32, i32
  }
  func.func @transform_5(%arg0: i32, %arg1: i32) -> (i32, i32) {
    %c0_i32 = arith.constant 0 : i32
    %c0_i32_0 = arith.constant 0 : i32
    %c0_i32_1 = arith.constant 0 : i32
    return %c0_i32, %c0_i32_0 : i32, i32
  }
  func.func @transform_6(%arg0: i32, %arg1: i32) -> (i32, i32) {
    %c0_i32 = arith.constant 0 : i32
    %c0_i32_0 = arith.constant 0 : i32
    %c0_i32_1 = arith.constant 0 : i32
    return %c0_i32, %c0_i32_0 : i32, i32
  }
  func.func @transform_7(%arg0: i32, %arg1: i32) -> (i32, i32) {
    %c0_i32 = arith.constant 0 : i32
    %c0_i32_0 = arith.constant 0 : i32
    %c0_i32_1 = arith.constant 0 : i32
    return %c0_i32, %c0_i32_0 : i32, i32
  }
  func.func @transform_8(%arg0: i32, %arg1: i32) -> (i32, i32) {
    %c0_i32 = arith.constant 0 : i32
    %c0_i32_0 = arith.constant 0 : i32
    %c0_i32_1 = arith.constant 0 : i32
    return %c0_i32, %c0_i32_0 : i32, i32
  }
  func.func @transform_9(%arg0: i32, %arg1: i32) -> (i32, i32) {
    %c0_i32 = arith.constant 0 : i32
    %c0_i32_0 = arith.constant 0 : i32
    %c0_i32_1 = arith.constant 0 : i32
    return %c0_i32, %c0_i32_0 : i32, i32
  }
  func.func @transform_10(%arg0: i32, %arg1: i32) -> (i32, i32) {
    %c0_i32 = arith.constant 0 : i32
    %c0_i32_0 = arith.constant 0 : i32
    %c0_i32_1 = arith.constant 0 : i32
    return %c0_i32, %c0_i32_0 : i32, i32
  }
  func.func @transform_11(%arg0: i32, %arg1: i32) -> (i32, i32) {
    %c0_i32 = arith.constant 0 : i32
    %c0_i32_0 = arith.constant 0 : i32
    %c0_i32_1 = arith.constant 0 : i32
    return %c0_i32, %c0_i32_0 : i32, i32
  }
  func.func @transform_12(%arg0: i32, %arg1: i32) -> (i32, i32) {
    %c0_i32 = arith.constant 0 : i32
    %c0_i32_0 = arith.constant 0 : i32
    %c0_i32_1 = arith.constant 0 : i32
    return %c0_i32, %c0_i32_0 : i32, i32
  }
  func.func @transform_13(%arg0: i32, %arg1: i32) -> (i32, i32) {
    %c0_i32 = arith.constant 0 : i32
    %c0_i32_0 = arith.constant 0 : i32
    %c0_i32_1 = arith.constant 0 : i32
    return %c0_i32, %c0_i32_0 : i32, i32
  }
  func.func @transform_14(%arg0: i32, %arg1: i32) -> (i32, i32) {
    %c0_i32 = arith.constant 0 : i32
    %c0_i32_0 = arith.constant 0 : i32
    %c0_i32_1 = arith.constant 0 : i32
    return %c0_i32, %c0_i32_0 : i32, i32
  }
  func.func @transform_15(%arg0: i32, %arg1: i32) -> (i32, i32) {
    %c0_i32 = arith.constant 0 : i32
    %c0_i32_0 = arith.constant 0 : i32
    %c0_i32_1 = arith.constant 0 : i32
    return %c0_i32, %c0_i32_0 : i32, i32
  }
  func.func @transform_16(%arg0: i32, %arg1: i32) -> (i32, i32) {
    %c0_i32 = arith.constant 0 : i32
    %c0_i32_0 = arith.constant 0 : i32
    %c0_i32_1 = arith.constant 0 : i32
    return %c0_i32, %c0_i32_0 : i32, i32
  }
  func.func @transform_17(%arg0: i32, %arg1: i32) -> (i32, i32) {
    %c0_i32 = arith.constant 0 : i32
    %c0_i32_0 = arith.constant 0 : i32
    %c0_i32_1 = arith.constant 0 : i32
    return %c0_i32, %c0_i32_0 : i32, i32
  }
  func.func @transform_18(%arg0: i32, %arg1: i32) -> (i32, i32) {
    %c0_i32 = arith.constant 0 : i32
    %c0_i32_0 = arith.constant 0 : i32
    %c0_i32_1 = arith.constant 0 : i32
    return %c0_i32, %c0_i32_0 : i32, i32
  }
  func.func @transform_19(%arg0: i32, %arg1: i32) -> (i32, i32) {
    %c0_i32 = arith.constant 0 : i32
    %c0_i32_0 = arith.constant 0 : i32
    %c0_i32_1 = arith.constant 0 : i32
    return %c0_i32, %c0_i32_0 : i32, i32
  }
  func.func @transform_20(%arg0: i32, %arg1: i32) -> (i32, i32) {
    %c0_i32 = arith.constant 0 : i32
    %c0_i32_0 = arith.constant 0 : i32
    %c0_i32_1 = arith.constant 0 : i32
    return %c0_i32, %c0_i32_0 : i32, i32
  }
  func.func @transform_21(%arg0: i32, %arg1: i32) -> (i32, i32, i32) {
    %c0_i32 = arith.constant 0 : i32
    %c0_i32_0 = arith.constant 0 : i32
    return %arg0, %arg1, %c0_i32 : i32, i32, i32
  }
  func.func @transform_22(%arg0: i32, %arg1: i32) -> (i32, i32, i32, i32) {
    %c0_i32 = arith.constant 0 : i32
    %c0_i32_0 = arith.constant 0 : i32
    %c0_i32_1 = arith.constant 0 : i32
    return %arg0, %c0_i32, %arg1, %c0_i32_0 : i32, i32, i32, i32
  }
}

</mosaic_0001>

<llo_original>
// kernel: tpu_custom_call.1
$region0: #{tpu_custom_call.1}
  #allocation0 [shape = 'u32[]', space=smem, size = 0x4, offset = 0x4, fixed_abs, tag = 'smem constant byte address 0x4 - core index']
  #allocation1 [shape = 'u32[144,128]{1,0:T(1,128)}', space=vmem, size = 0x12000, scoped, tag = 'internal scratch']
  %s0 = inlined_call_operand.vmem [shape: f32[2,8,32], index: 0, kind: input, shape index: {}]
  %s1 = inlined_call_operand.vmem [shape: bf16[2,8,32], index: 1, kind: input, shape index: {}]
  %s2 = inlined_call_operand.hbm [shape: bf16[2,8,32], index: 2, kind: input, shape index: {}]
  %s3 = inlined_call_operand.hbm [shape: bf16[2,8,8], index: 3, kind: input, shape index: {}]
  %s4 = inlined_call_operand.vmem [shape: bf16[2,8,1], index: 4, kind: input, shape index: {}]
  %s5 = inlined_call_operand.vmem [shape: bf16[32,32], index: 5, kind: input, shape index: {}]
  %s6 = inlined_call_operand.vmem [shape: f32[1,32], index: 6, kind: input, shape index: {}]
  %s7 = inlined_call_operand.vmem [shape: bf16[32,32], index: 7, kind: input, shape index: {}]
  %s8 = inlined_call_operand.vmem [shape: f32[1,32], index: 8, kind: input, shape index: {}]
  %s9 = inlined_call_operand.vmem [shape: bf16[32,64], index: 9, kind: input, shape index: {}]
  %s10 = inlined_call_operand.vmem [shape: f32[1,64], index: 10, kind: input, shape index: {}]
  %s11 = inlined_call_operand.vmem [shape: bf16[64,32], index: 11, kind: input, shape index: {}]
  %s12 = inlined_call_operand.vmem [shape: f32[1,32], index: 12, kind: input, shape index: {}]
  %s13 = inlined_call_operand.vmem [shape: f32[1,32], index: 13, kind: input, shape index: {}]
  %s14 = inlined_call_operand.vmem [shape: f32[1,32], index: 14, kind: input, shape index: {}]
  %s15 = inlined_call_operand.vmem [shape: bf16[32,64], index: 15, kind: input, shape index: {}]
  %s16 = inlined_call_operand.vmem [shape: f32[1,64], index: 16, kind: input, shape index: {}]
  %s17 = inlined_call_operand.vmem [shape: bf16[64,32], index: 17, kind: input, shape index: {}]
  %s18 = inlined_call_operand.vmem [shape: f32[1,32], index: 18, kind: input, shape index: {}]
  %s19 = inlined_call_operand.vmem [shape: f32[1,32], index: 19, kind: input, shape index: {}]
  %s20 = inlined_call_operand.vmem [shape: f32[1,32], index: 20, kind: input, shape index: {}]
  %s21 = inlined_call_operand.hbm [shape: f32[2,8,32], index: 21, kind: output, shape index: {0}]
  %s22 = inlined_call_operand.hbm [shape: bf16[2,2,8,8], index: 22, kind: output, shape index: {1}]
  %23 = xla_tuple %s21, %s22
  %s24 = sld [smem:[#allocation0]]
  $region133: #{tpu_custom_call.1} parent=0
    _
  %s26 = ssub.s32 1, %s24
  %s27 = scalar_select 0, %s26, %s24
  $region1: #{tpu_custom_call.1} parent=0
    #allocation2 [shape = 'u8[4096]{0}', space=vmem, size = 0x1000, scoped, tag = 'input window, operand 2']
    #allocation3 [shape = 's32[2]{0}', space=sflag, size = 0x8, scoped, tag = 'scoped memory for tpu_custom_call.1']
    #allocation4 [shape = 's32[2]{0}', space=sflag, size = 0x8, scoped, tag = 'scoped memory for tpu_custom_call.1']
    #allocation5 [shape = 'u8[4096]{0}', space=vmem, size = 0x1000, scoped, tag = 'input window, operand 3']
    #allocation6 [shape = 's32[2]{0}', space=sflag, size = 0x8, scoped, tag = 'scoped memory for tpu_custom_call.1']
    #allocation7 [shape = 'u8[8192]{0}', space=vmem, size = 0x2000, scoped, tag = 'output window, operand 0']
    #allocation8 [shape = 'u8[8192]{0}', space=vmem, size = 0x2000, scoped, tag = 'output window, operand 1']
    #allocation9 [shape = 's32[2]{0}', space=sflag, size = 0x8, scoped, tag = 'scoped memory for tpu_custom_call.1']
    %28 = vsyncpa [#allocation3], 0
    %s29 = scalar_lea.sflag [#allocation3], 1
    %30 = vsyncpa %s29, 0
    %31 = vsyncpa [#allocation6], 0
    %s32 = scalar_lea.sflag [#allocation6], 1
    %33 = vsyncpa %s32, 0
    %34 = vsyncpa [#allocation4], 0
    %s35 = scalar_lea.sflag [#allocation4], 1
    %36 = vsyncpa %s35, 0
    %37 = vsyncpa [#allocation9], 0
    %s38 = scalar_lea.sflag [#allocation9], 1
    %39 = vsyncpa %s38, 0
    loop: start=0, step=1, limit=4
    $region2: #{tpu_custom_call.1} parent=1 // loop_pre_header
      _
    $region3: #{tpu_custom_call.1} parent=1 // loop_header
      %s41 = sphi 0, %s45
      %p42 = scmp.ge.s32.totalorder %s41, 4
      %s48 = sphi 0, %s60
      %s49 = sphi 0, %s56
      %s50 = sphi 0, %s48
      %s51 = sphi 0, %s49
      %s52 = sphi 0, %s50
      %s53 = sphi 0, %s51
      %s65 = sphi 0, %s67
      %s68 = sphi 0, %s65
      %s69 = sphi 0, %s68
      %s85 = sphi 0, %s69
      %s91 = sphi 0, %s93
      %s94 = sphi 0, %s91
      %s95 = sphi 0, %s94
      %s111 = sphi 0, %s95
      %s117 = sphi 0, %s119
      %s120 = sphi 0, %s117
      %s121 = sphi 0, %s120
      %s137 = sphi 0, %s121
      %s145 = sphi 0, %s147
      %s148 = sphi 0, %s145
      %s149 = sphi 0, %s148
      %s165 = sphi 0, %s149
      %s173 = sphi 0, %s175
      %s176 = sphi 0, %s173
      %s177 = sphi 0, %s176
      %s193 = sphi 0, %s177
      %s197 = sphi 0, %s197
      %s199 = sphi 0, %s197
      %s200 = sphi 0, %s199
      %s214 = sphi 0, %s200
      %s218 = sphi 0, %s218
      %s220 = sphi 0, %s218
      %s221 = sphi 0, %s220
      %s235 = sphi 0, %s221
      %s239 = sphi 0, %s239
      %s241 = sphi 0, %s239
      %s242 = sphi 0, %s241
      %s256 = sphi 0, %s242
      %s260 = sphi 0, %s260
      %s262 = sphi 0, %s260
      %s263 = sphi 0, %s262
      %s277 = sphi 0, %s263
      %s281 = sphi 0, %s281
      %s283 = sphi 0, %s281
      %s284 = sphi 0, %s283
      %s298 = sphi 0, %s284
      %s302 = sphi 0, %s302
      %s304 = sphi 0, %s302
      %s305 = sphi 0, %s304
      %s319 = sphi 0, %s305
      %s323 = sphi 0, %s323
      %s325 = sphi 0, %s323
      %s326 = sphi 0, %s325
      %s340 = sphi 0, %s326
      %s344 = sphi 0, %s344
      %s346 = sphi 0, %s344
      %s347 = sphi 0, %s346
      %s361 = sphi 0, %s347
      %s365 = sphi 0, %s365
      %s367 = sphi 0, %s365
      %s368 = sphi 0, %s367
      %s382 = sphi 0, %s368
      %s386 = sphi 0, %s386
      %s388 = sphi 0, %s386
      %s389 = sphi 0, %s388
      %s403 = sphi 0, %s389
      %s407 = sphi 0, %s407
      %s409 = sphi 0, %s407
      %s410 = sphi 0, %s409
      %s424 = sphi 0, %s410
      %s428 = sphi 0, %s428
      %s430 = sphi 0, %s428
      %s431 = sphi 0, %s430
      %s445 = sphi 0, %s431
      %s449 = sphi 0, %s449
      %s451 = sphi 0, %s449
      %s452 = sphi 0, %s451
      %s466 = sphi 0, %s452
      %s470 = sphi 0, %s470
      %s472 = sphi 0, %s470
      %s473 = sphi 0, %s472
      %s487 = sphi 0, %s473
      %s491 = sphi 0, %s491
      %s493 = sphi 0, %s491
      %s494 = sphi 0, %s493
      %s508 = sphi 0, %s494
      %s512 = sphi 0, %s512
      %s514 = sphi 0, %s512
      %s515 = sphi 0, %s514
      %s529 = sphi 0, %s515
      %s537 = sphi 0, %s539
      %s540 = sphi 0, %s537
      %s541 = sphi 0, %s540
      %s557 = sphi 0, %s541
      %s565 = sphi 0, %s567
      %s568 = sphi 0, %s565
      %s569 = sphi 0, %s568
      %s585 = sphi 0, %s569
    $region4: #{tpu_custom_call.1} parent=1 // loop_header_branch
      %44 = sbr.rel (%p42) target = $region8
    $region5: #{tpu_custom_call.1} parent=1 // loop_body
      %s46 = ssub.s32 %s41, 1
      %s47 = ssub.s32 %s41, 2
      %s54 = sadd.s32 1, %s49
      %p55 = scmp.ge.s32.totalorder %s54, 1
      %s56 = scalar_select %p55, 0, %s54
      %s57 = sadd.s32 1, %s48
      %s58 = scalar_select %p55, %s57, %s48
      %p59 = scmp.ge.s32.totalorder %s58, 2
      %s60 = scalar_select %p59, 0, %s58
      %s61 = ssub.s32 %s48, %s60
      %s62 = ssub.s32 %s49, %s56
      %s63 = sor.u32 %s61, %s62
      %p64 = scmp.eq.s32.totalorder %s63, 0
      %s66 = sadd.s32 %s65, 1
      %s67 = scalar_select %p64, %s65, %s66
      %p70 = pneg %p64
      %p71 = scmp.eq.s32.totalorder %s41, 1
      %p72 = por %p70, %p71
      %p73 = scmp.ne.s32.totalorder %s65, %s68
      %p74 = scmp.eq.s32.totalorder %s41, 0
      %p75 = por %p73, %p74
      %p76 = scmp.ne.s32.totalorder %s65, %s68
      %p77 = scmp.eq.s32.totalorder %s46, 1
      %p78 = por %p76, %p77
      %p79 = scmp.ne.s32.totalorder %s68, %s69
      %p80 = scmp.eq.s32.totalorder %s46, 0
      %p81 = por %p79, %p80
      %p82 = scmp.ne.s32.totalorder %s68, %s69
      %p83 = scmp.eq.s32.totalorder %s47, 1
      %p84 = por %p82, %p83
      %p86 = scmp.ne.s32.totalorder %s69, %s85
      %p87 = scmp.eq.s32.totalorder %s47, 0
      %p88 = por %p86, %p87
      %s89 = ssub.s32 %s48, %s60
      %p90 = scmp.eq.s32.totalorder %s89, 0
      %s92 = sadd.s32 %s91, 1
      %s93 = scalar_select %p90, %s91, %s92
      %p96 = pneg %p90
      %p97 = scmp.eq.s32.totalorder %s41, 1
      %p98 = por %p96, %p97
      %p99 = scmp.ne.s32.totalorder %s91, %s94
      %p100 = scmp.eq.s32.totalorder %s41, 0
      %p101 = por %p99, %p100
      %p102 = scmp.ne.s32.totalorder %s91, %s94
      %p103 = scmp.eq.s32.totalorder %s46, 1
      %p104 = por %p102, %p103
      %p105 = scmp.ne.s32.totalorder %s94, %s95
      %p106 = scmp.eq.s32.totalorder %s46, 0
      %p107 = por %p105, %p106
      %p108 = scmp.ne.s32.totalorder %s94, %s95
      %p109 = scmp.eq.s32.totalorder %s47, 1
      %p110 = por %p108, %p109
      %p112 = scmp.ne.s32.totalorder %s95, %s111
      %p113 = scmp.eq.s32.totalorder %s47, 0
      %p114 = por %p112, %p113
      %s115 = ssub.s32 %s48, %s60
      %p116 = scmp.eq.s32.totalorder %s115, 0
      %s118 = sadd.s32 %s117, 1
      %s119 = scalar_select %p116, %s117, %s118
      %p122 = pneg %p116
      %p123 = scmp.eq.s32.totalorder %s41, 1
      %p124 = por %p122, %p123
      %p125 = scmp.ne.s32.totalorder %s117, %s120
      %p126 = scmp.eq.s32.totalorder %s41, 0
      %p127 = por %p125, %p126
      %p128 = scmp.ne.s32.totalorder %s117, %s120
      %p129 = scmp.eq.s32.totalorder %s46, 1
      %p130 = por %p128, %p129
      %p131 = scmp.ne.s32.totalorder %s120, %s121
      %p132 = scmp.eq.s32.totalorder %s46, 0
      %p133 = por %p131, %p132
      %p134 = scmp.ne.s32.totalorder %s120, %s121
      %p135 = scmp.eq.s32.totalorder %s47, 1
      %p136 = por %p134, %p135
      %p138 = scmp.ne.s32.totalorder %s121, %s137
      %p139 = scmp.eq.s32.totalorder %s47, 0
      %p140 = por %p138, %p139
      %s141 = ssub.s32 %s48, %s60
      %s142 = ssub.s32 %s49, %s56
      %s143 = sor.u32 %s141, %s142
      %p144 = scmp.eq.s32.totalorder %s143, 0
      %s146 = sadd.s32 %s145, 1
      %s147 = scalar_select %p144, %s145, %s146
      %p150 = pneg %p144
      %p151 = scmp.eq.s32.totalorder %s41, 1
      %p152 = por %p150, %p151
      %p153 = scmp.ne.s32.totalorder %s145, %s148
      %p154 = scmp.eq.s32.totalorder %s41, 0
      %p155 = por %p153, %p154
      %p156 = scmp.ne.s32.totalorder %s145, %s148
      %p157 = scmp.eq.s32.totalorder %s46, 1
      %p158 = por %p156, %p157
      %p159 = scmp.ne.s32.totalorder %s148, %s149
      %p160 = scmp.eq.s32.totalorder %s46, 0
      %p161 = por %p159, %p160
      %p162 = scmp.ne.s32.totalorder %s148, %s149
      %p163 = scmp.eq.s32.totalorder %s47, 1
      %p164 = por %p162, %p163
      %p166 = scmp.ne.s32.totalorder %s149, %s165
      %p167 = scmp.eq.s32.totalorder %s47, 0
      %p168 = por %p166, %p167
      %s169 = ssub.s32 %s48, %s60
      %s170 = ssub.s32 %s49, %s56
      %s171 = sor.u32 %s169, %s170
      %p172 = scmp.eq.s32.totalorder %s171, 0
      %s174 = sadd.s32 %s173, 1
      %s175 = scalar_select %p172, %s173, %s174
      %p178 = pneg %p172
      %p179 = scmp.eq.s32.totalorder %s41, 1
      %p180 = por %p178, %p179
      %p181 = scmp.ne.s32.totalorder %s173, %s176
      %p182 = scmp.eq.s32.totalorder %s41, 0
      %p183 = por %p181, %p182
      %p184 = scmp.ne.s32.totalorder %s173, %s176
      %p185 = scmp.eq.s32.totalorder %s46, 1
      %p186 = por %p184, %p185
      %p187 = scmp.ne.s32.totalorder %s176, %s177
      %p188 = scmp.eq.s32.totalorder %s46, 0
      %p189 = por %p187, %p188
      %p190 = scmp.ne.s32.totalorder %s176, %s177
      %p191 = scmp.eq.s32.totalorder %s47, 1
      %p192 = por %p190, %p191
      %p194 = scmp.ne.s32.totalorder %s177, %s193
      %p195 = scmp.eq.s32.totalorder %s47, 0
      %p196 = por %p194, %p195
      %s198 = sadd.s32 %s197, 1
      %p201 = scmp.eq.s32.totalorder %s41, 1
      %p202 = scmp.ne.s32.totalorder %s197, %s199
      %p203 = scmp.eq.s32.totalorder %s41, 0
      %p204 = por %p202, %p203
      %p205 = scmp.ne.s32.totalorder %s197, %s199
      %p206 = scmp.eq.s32.totalorder %s46, 1
      %p207 = por %p205, %p206
      %p208 = scmp.ne.s32.totalorder %s199, %s200
      %p209 = scmp.eq.s32.totalorder %s46, 0
      %p210 = por %p208, %p209
      %p211 = scmp.ne.s32.totalorder %s199, %s200
      %p212 = scmp.eq.s32.totalorder %s47, 1
      %p213 = por %p211, %p212
      %p215 = scmp.ne.s32.totalorder %s200, %s214
      %p216 = scmp.eq.s32.totalorder %s47, 0
      %p217 = por %p215, %p216
      %s219 = sadd.s32 %s218, 1
      %p222 = scmp.eq.s32.totalorder %s41, 1
      %p223 = scmp.ne.s32.totalorder %s218, %s220
      %p224 = scmp.eq.s32.totalorder %s41, 0
      %p225 = por %p223, %p224
      %p226 = scmp.ne.s32.totalorder %s218, %s220
      %p227 = scmp.eq.s32.totalorder %s46, 1
      %p228 = por %p226, %p227
      %p229 = scmp.ne.s32.totalorder %s220, %s221
      %p230 = scmp.eq.s32.totalorder %s46, 0
      %p231 = por %p229, %p230
      %p232 = scmp.ne.s32.totalorder %s220, %s221
      %p233 = scmp.eq.s32.totalorder %s47, 1
      %p234 = por %p232, %p233
      %p236 = scmp.ne.s32.totalorder %s221, %s235
      %p237 = scmp.eq.s32.totalorder %s47, 0
      %p238 = por %p236, %p237
      %s240 = sadd.s32 %s239, 1
      %p243 = scmp.eq.s32.totalorder %s41, 1
      %p244 = scmp.ne.s32.totalorder %s239, %s241
      %p245 = scmp.eq.s32.totalorder %s41, 0
      %p246 = por %p244, %p245
      %p247 = scmp.ne.s32.totalorder %s239, %s241
      %p248 = scmp.eq.s32.totalorder %s46, 1
      %p249 = por %p247, %p248
      %p250 = scmp.ne.s32.totalorder %s241, %s242
      %p251 = scmp.eq.s32.totalorder %s46, 0
      %p252 = por %p250, %p251
      %p253 = scmp.ne.s32.totalorder %s241, %s242
      %p254 = scmp.eq.s32.totalorder %s47, 1
      %p255 = por %p253, %p254
      %p257 = scmp.ne.s32.totalorder %s242, %s256
      %p258 = scmp.eq.s32.totalorder %s47, 0
      %p259 = por %p257, %p258
      %s261 = sadd.s32 %s260, 1
      %p264 = scmp.eq.s32.totalorder %s41, 1
      %p265 = scmp.ne.s32.totalorder %s260, %s262
      %p266 = scmp.eq.s32.totalorder %s41, 0
      %p267 = por %p265, %p266
      %p268 = scmp.ne.s32.totalorder %s260, %s262
      %p269 = scmp.eq.s32.totalorder %s46, 1
      %p270 = por %p268, %p269
      %p271 = scmp.ne.s32.totalorder %s262, %s263
      %p272 = scmp.eq.s32.totalorder %s46, 0
      %p273 = por %p271, %p272
      %p274 = scmp.ne.s32.totalorder %s262, %s263
      %p275 = scmp.eq.s32.totalorder %s47, 1
      %p276 = por %p274, %p275
      %p278 = scmp.ne.s32.totalorder %s263, %s277
      %p279 = scmp.eq.s32.totalorder %s47, 0
      %p280 = por %p278, %p279
      %s282 = sadd.s32 %s281, 1
      %p285 = scmp.eq.s32.totalorder %s41, 1
      %p286 = scmp.ne.s32.totalorder %s281, %s283
      %p287 = scmp.eq.s32.totalorder %s41, 0
      %p288 = por %p286, %p287
      %p289 = scmp.ne.s32.totalorder %s281, %s283
      %p290 = scmp.eq.s32.totalorder %s46, 1
      %p291 = por %p289, %p290
      %p292 = scmp.ne.s32.totalorder %s283, %s284
      %p293 = scmp.eq.s32.totalorder %s46, 0
      %p294 = por %p292, %p293
      %p295 = scmp.ne.s32.totalorder %s283, %s284
      %p296 = scmp.eq.s32.totalorder %s47, 1
      %p297 = por %p295, %p296
      %p299 = scmp.ne.s32.totalorder %s284, %s298
      %p300 = scmp.eq.s32.totalorder %s47, 0
      %p301 = por %p299, %p300
      %s303 = sadd.s32 %s302, 1
      %p306 = scmp.eq.s32.totalorder %s41, 1
      %p307 = scmp.ne.s32.totalorder %s302, %s304
      %p308 = scmp.eq.s32.totalorder %s41, 0
      %p309 = por %p307, %p308
      %p310 = scmp.ne.s32.totalorder %s302, %s304
      %p311 = scmp.eq.s32.totalorder %s46, 1
      %p312 = por %p310, %p311
      %p313 = scmp.ne.s32.totalorder %s304, %s305
      %p314 = scmp.eq.s32.totalorder %s46, 0
      %p315 = por %p313, %p314
      %p316 = scmp.ne.s32.totalorder %s304, %s305
      %p317 = scmp.eq.s32.totalorder %s47, 1
      %p318 = por %p316, %p317
      %p320 = scmp.ne.s32.totalorder %s305, %s319
      %p321 = scmp.eq.s32.totalorder %s47, 0
      %p322 = por %p320, %p321
      %s324 = sadd.s32 %s323, 1
      %p327 = scmp.eq.s32.totalorder %s41, 1
      %p328 = scmp.ne.s32.totalorder %s323, %s325
      %p329 = scmp.eq.s32.totalorder %s41, 0
      %p330 = por %p328, %p329
      %p331 = scmp.ne.s32.totalorder %s323, %s325
      %p332 = scmp.eq.s32.totalorder %s46, 1
      %p333 = por %p331, %p332
      %p334 = scmp.ne.s32.totalorder %s325, %s326
      %p335 = scmp.eq.s32.totalorder %s46, 0
      %p336 = por %p334, %p335
      %p337 = scmp.ne.s32.totalorder %s325, %s326
      %p338 = scmp.eq.s32.totalorder %s47, 1
      %p339 = por %p337, %p338
      %p341 = scmp.ne.s32.totalorder %s326, %s340
      %p342 = scmp.eq.s32.totalorder %s47, 0
      %p343 = por %p341, %p342
      %s345 = sadd.s32 %s344, 1
      %p348 = scmp.eq.s32.totalorder %s41, 1
      %p349 = scmp.ne.s32.totalorder %s344, %s346
      %p350 = scmp.eq.s32.totalorder %s41, 0
      %p351 = por %p349, %p350
      %p352 = scmp.ne.s32.totalorder %s344, %s346
      %p353 = scmp.eq.s32.totalorder %s46, 1
      %p354 = por %p352, %p353
      %p355 = scmp.ne.s32.totalorder %s346, %s347
      %p356 = scmp.eq.s32.totalorder %s46, 0
      %p357 = por %p355, %p356
      %p358 = scmp.ne.s32.totalorder %s346, %s347
      %p359 = scmp.eq.s32.totalorder %s47, 1
      %p360 = por %p358, %p359
      %p362 = scmp.ne.s32.totalorder %s347, %s361
      %p363 = scmp.eq.s32.totalorder %s47, 0
      %p364 = por %p362, %p363
      %s366 = sadd.s32 %s365, 1
      %p369 = scmp.eq.s32.totalorder %s41, 1
      %p370 = scmp.ne.s32.totalorder %s365, %s367
      %p371 = scmp.eq.s32.totalorder %s41, 0
      %p372 = por %p370, %p371
      %p373 = scmp.ne.s32.totalorder %s365, %s367
      %p374 = scmp.eq.s32.totalorder %s46, 1
      %p375 = por %p373, %p374
      %p376 = scmp.ne.s32.totalorder %s367, %s368
      %p377 = scmp.eq.s32.totalorder %s46, 0
      %p378 = por %p376, %p377
      %p379 = scmp.ne.s32.totalorder %s367, %s368
      %p380 = scmp.eq.s32.totalorder %s47, 1
      %p381 = por %p379, %p380
      %p383 = scmp.ne.s32.totalorder %s368, %s382
      %p384 = scmp.eq.s32.totalorder %s47, 0
      %p385 = por %p383, %p384
      %s387 = sadd.s32 %s386, 1
      %p390 = scmp.eq.s32.totalorder %s41, 1
      %p391 = scmp.ne.s32.totalorder %s386, %s388
      %p392 = scmp.eq.s32.totalorder %s41, 0
      %p393 = por %p391, %p392
      %p394 = scmp.ne.s32.totalorder %s386, %s388
      %p395 = scmp.eq.s32.totalorder %s46, 1
      %p396 = por %p394, %p395
      %p397 = scmp.ne.s32.totalorder %s388, %s389
      %p398 = scmp.eq.s32.totalorder %s46, 0
      %p399 = por %p397, %p398
      %p400 = scmp.ne.s32.totalorder %s388, %s389
      %p401 = scmp.eq.s32.totalorder %s47, 1
      %p402 = por %p400, %p401
      %p404 = scmp.ne.s32.totalorder %s389, %s403
      %p405 = scmp.eq.s32.totalorder %s47, 0
      %p406 = por %p404, %p405
      %s408 = sadd.s32 %s407, 1
      %p411 = scmp.eq.s32.totalorder %s41, 1
      %p412 = scmp.ne.s32.totalorder %s407, %s409
      %p413 = scmp.eq.s32.totalorder %s41, 0
      %p414 = por %p412, %p413
      %p415 = scmp.ne.s32.totalorder %s407, %s409
      %p416 = scmp.eq.s32.totalorder %s46, 1
      %p417 = por %p415, %p416
      %p418 = scmp.ne.s32.totalorder %s409, %s410
      %p419 = scmp.eq.s32.totalorder %s46, 0
      %p420 = por %p418, %p419
      %p421 = scmp.ne.s32.totalorder %s409, %s410
      %p422 = scmp.eq.s32.totalorder %s47, 1
      %p423 = por %p421, %p422
      %p425 = scmp.ne.s32.totalorder %s410, %s424
      %p426 = scmp.eq.s32.totalorder %s47, 0
      %p427 = por %p425, %p426
      %s429 = sadd.s32 %s428, 1
      %p432 = scmp.eq.s32.totalorder %s41, 1
      %p433 = scmp.ne.s32.totalorder %s428, %s430
      %p434 = scmp.eq.s32.totalorder %s41, 0
      %p435 = por %p433, %p434
      %p436 = scmp.ne.s32.totalorder %s428, %s430
      %p437 = scmp.eq.s32.totalorder %s46, 1
      %p438 = por %p436, %p437
      %p439 = scmp.ne.s32.totalorder %s430, %s431
      %p440 = scmp.eq.s32.totalorder %s46, 0
      %p441 = por %p439, %p440
      %p442 = scmp.ne.s32.totalorder %s430, %s431
      %p443 = scmp.eq.s32.totalorder %s47, 1
      %p444 = por %p442, %p443
      %p446 = scmp.ne.s32.totalorder %s431, %s445
      %p447 = scmp.eq.s32.totalorder %s47, 0
      %p448 = por %p446, %p447
      %s450 = sadd.s32 %s449, 1
      %p453 = scmp.eq.s32.totalorder %s41, 1
      %p454 = scmp.ne.s32.totalorder %s449, %s451
      %p455 = scmp.eq.s32.totalorder %s41, 0
      %p456 = por %p454, %p455
      %p457 = scmp.ne.s32.totalorder %s449, %s451
      %p458 = scmp.eq.s32.totalorder %s46, 1
      %p459 = por %p457, %p458
      %p460 = scmp.ne.s32.totalorder %s451, %s452
      %p461 = scmp.eq.s32.totalorder %s46, 0
      %p462 = por %p460, %p461
      %p463 = scmp.ne.s32.totalorder %s451, %s452
      %p464 = scmp.eq.s32.totalorder %s47, 1
      %p465 = por %p463, %p464
      %p467 = scmp.ne.s32.totalorder %s452, %s466
      %p468 = scmp.eq.s32.totalorder %s47, 0
      %p469 = por %p467, %p468
      %s471 = sadd.s32 %s470, 1
      %p474 = scmp.eq.s32.totalorder %s41, 1
      %p475 = scmp.ne.s32.totalorder %s470, %s472
      %p476 = scmp.eq.s32.totalorder %s41, 0
      %p477 = por %p475, %p476
      %p478 = scmp.ne.s32.totalorder %s470, %s472
      %p479 = scmp.eq.s32.totalorder %s46, 1
      %p480 = por %p478, %p479
      %p481 = scmp.ne.s32.totalorder %s472, %s473
      %p482 = scmp.eq.s32.totalorder %s46, 0
      %p483 = por %p481, %p482
      %p484 = scmp.ne.s32.totalorder %s472, %s473
      %p485 = scmp.eq.s32.totalorder %s47, 1
      %p486 = por %p484, %p485
      %p488 = scmp.ne.s32.totalorder %s473, %s487
      %p489 = scmp.eq.s32.totalorder %s47, 0
      %p490 = por %p488, %p489
      %s492 = sadd.s32 %s491, 1
      %p495 = scmp.eq.s32.totalorder %s41, 1
      %p496 = scmp.ne.s32.totalorder %s491, %s493
      %p497 = scmp.eq.s32.totalorder %s41, 0
      %p498 = por %p496, %p497
      %p499 = scmp.ne.s32.totalorder %s491, %s493
      %p500 = scmp.eq.s32.totalorder %s46, 1
      %p501 = por %p499, %p500
      %p502 = scmp.ne.s32.totalorder %s493, %s494
      %p503 = scmp.eq.s32.totalorder %s46, 0
      %p504 = por %p502, %p503
      %p505 = scmp.ne.s32.totalorder %s493, %s494
      %p506 = scmp.eq.s32.totalorder %s47, 1
      %p507 = por %p505, %p506
      %p509 = scmp.ne.s32.totalorder %s494, %s508
      %p510 = scmp.eq.s32.totalorder %s47, 0
      %p511 = por %p509, %p510
      %s513 = sadd.s32 %s512, 1
      %p516 = scmp.eq.s32.totalorder %s41, 1
      %p517 = scmp.ne.s32.totalorder %s512, %s514
      %p518 = scmp.eq.s32.totalorder %s41, 0
      %p519 = por %p517, %p518
      %p520 = scmp.ne.s32.totalorder %s512, %s514
      %p521 = scmp.eq.s32.totalorder %s46, 1
      %p522 = por %p520, %p521
      %p523 = scmp.ne.s32.totalorder %s514, %s515
      %p524 = scmp.eq.s32.totalorder %s46, 0
      %p525 = por %p523, %p524
      %p526 = scmp.ne.s32.totalorder %s514, %s515
      %p527 = scmp.eq.s32.totalorder %s47, 1
      %p528 = por %p526, %p527
      %p530 = scmp.ne.s32.totalorder %s515, %s529
      %p531 = scmp.eq.s32.totalorder %s47, 0
      %p532 = por %p530, %p531
      %s533 = ssub.s32 %s48, %s60
      %s534 = ssub.s32 %s49, %s56
      %s535 = sor.u32 %s533, %s534
      %p536 = scmp.eq.s32.totalorder %s535, 0
      %s538 = sadd.s32 %s537, 1
      %s539 = scalar_select %p536, %s537, %s538
      %p542 = pneg %p536
      %p543 = scmp.eq.s32.totalorder %s41, 1
      %p544 = por %p542, %p543
      %p545 = scmp.ne.s32.totalorder %s537, %s540
      %p546 = scmp.eq.s32.totalorder %s41, 0
      %p547 = por %p545, %p546
      %p548 = scmp.ne.s32.totalorder %s537, %s540
      %p549 = scmp.eq.s32.totalorder %s46, 1
      %p550 = por %p548, %p549
      %p551 = scmp.ne.s32.totalorder %s540, %s541
      %p552 = scmp.eq.s32.totalorder %s46, 0
      %p553 = por %p551, %p552
      %p554 = scmp.ne.s32.totalorder %s540, %s541
      %p555 = scmp.eq.s32.totalorder %s47, 1
      %p556 = por %p554, %p555
      %p558 = scmp.ne.s32.totalorder %s541, %s557
      %p559 = scmp.eq.s32.totalorder %s47, 0
      %p560 = por %p558, %p559
      %s561 = ssub.s32 %s48, %s60
      %s562 = ssub.s32 %s49, %s56
      %s563 = sor.u32 %s561, %s562
      %p564 = scmp.eq.s32.totalorder %s563, 0
      %s566 = sadd.s32 %s565, 1
      %s567 = scalar_select %p564, %s565, %s566
      %p570 = pneg %p564
      %p571 = scmp.eq.s32.totalorder %s41, 1
      %p572 = por %p570, %p571
      %p573 = scmp.ne.s32.totalorder %s565, %s568
      %p574 = scmp.eq.s32.totalorder %s41, 0
      %p575 = por %p573, %p574
      %p576 = scmp.ne.s32.totalorder %s565, %s568
      %p577 = scmp.eq.s32.totalorder %s46, 1
      %p578 = por %p576, %p577
      %p579 = scmp.ne.s32.totalorder %s568, %s569
      %p580 = scmp.eq.s32.totalorder %s46, 0
      %p581 = por %p579, %p580
      %p582 = scmp.ne.s32.totalorder %s568, %s569
      %p583 = scmp.eq.s32.totalorder %s47, 1
      %p584 = por %p582, %p583
      %p586 = scmp.ne.s32.totalorder %s569, %s585
      %p587 = scmp.eq.s32.totalorder %s47, 0
      %p588 = por %p586, %p587
      %p589 = scmp.le.s32.totalorder 1, %s41
      %p590 = scmp.lt.s32.totalorder %s41, 3
      %p591 = pnand %p589, %p590
      %p592 = pneg %p591
      // Predicated region
      $region9: #{tpu_custom_call.1} parent=5 // pred_check
        _
      $region10: #{tpu_custom_call.1} parent=5 // pred_check_branch
        %594 = sbr.rel (%p591) target = $region12
      $region11: #{tpu_custom_call.1} parent=5 // pred_region
        %s595 = ssub.s32 %s41, 1
        // Predicated region
        $region13: #{tpu_custom_call.1} parent=11 // pred_check
          %p596 = pneg %p210
        $region14: #{tpu_custom_call.1} parent=11 // pred_check_branch
          %598 = sbr.rel (%p596) target = $region16
        $region15: #{tpu_custom_call.1} parent=11 // pred_region
          _
        $region16: #{tpu_custom_call.1} parent=11 // pred_fallthru
          _
        // Predicated region
        $region17: #{tpu_custom_call.1} parent=11 // pred_check
          %p599 = pneg %p231
        $region18: #{tpu_custom_call.1} parent=11 // pred_check_branch
          %601 = sbr.rel (%p599) target = $region20
        $region19: #{tpu_custom_call.1} parent=11 // pred_region
          _
        $region20: #{tpu_custom_call.1} parent=11 // pred_fallthru
          _
        // Predicated region
        $region21: #{tpu_custom_call.1} parent=11 // pred_check
          %p602 = pneg %p252
        $region22: #{tpu_custom_call.1} parent=11 // pred_check_branch
          %604 = sbr.rel (%p602) target = $region24
        $region23: #{tpu_custom_call.1} parent=11 // pred_region
          _
        $region24: #{tpu_custom_call.1} parent=11 // pred_fallthru
          _
        // Predicated region
        $region25: #{tpu_custom_call.1} parent=11 // pred_check
          %p605 = pneg %p273
        $region26: #{tpu_custom_call.1} parent=11 // pred_check_branch
          %607 = sbr.rel (%p605) target = $region28
        $region27: #{tpu_custom_call.1} parent=11 // pred_region
          _
        $region28: #{tpu_custom_call.1} parent=11 // pred_fallthru
          _
        // Predicated region
        $region29: #{tpu_custom_call.1} parent=11 // pred_check
          %p608 = pneg %p294
        $region30: #{tpu_custom_call.1} parent=11 // pred_check_branch
          %610 = sbr.rel (%p608) target = $region32
        $region31: #{tpu_custom_call.1} parent=11 // pred_region
          _
        $region32: #{tpu_custom_call.1} parent=11 // pred_fallthru
          _
        // Predicated region
        $region33: #{tpu_custom_call.1} parent=11 // pred_check
          %p611 = pneg %p315
        $region34: #{tpu_custom_call.1} parent=11 // pred_check_branch
          %613 = sbr.rel (%p611) target = $region36
        $region35: #{tpu_custom_call.1} parent=11 // pred_region
          _
        $region36: #{tpu_custom_call.1} parent=11 // pred_fallthru
          _
        // Predicated region
        $region37: #{tpu_custom_call.1} parent=11 // pred_check
          %p614 = pneg %p336
        $region38: #{tpu_custom_call.1} parent=11 // pred_check_branch
          %616 = sbr.rel (%p614) target = $region40
        $region39: #{tpu_custom_call.1} parent=11 // pred_region
          _
        $region40: #{tpu_custom_call.1} parent=11 // pred_fallthru
          _
        // Predicated region
        $region41: #{tpu_custom_call.1} parent=11 // pred_check
          %p617 = pneg %p357
        $region42: #{tpu_custom_call.1} parent=11 // pred_check_branch
          %619 = sbr.rel (%p617) target = $region44
        $region43: #{tpu_custom_call.1} parent=11 // pred_region
          _
        $region44: #{tpu_custom_call.1} parent=11 // pred_fallthru
          _
        // Predicated region
        $region45: #{tpu_custom_call.1} parent=11 // pred_check
          %p620 = pneg %p378
        $region46: #{tpu_custom_call.1} parent=11 // pred_check_branch
          %622 = sbr.rel (%p620) target = $region48
        $region47: #{tpu_custom_call.1} parent=11 // pred_region
          _
        $region48: #{tpu_custom_call.1} parent=11 // pred_fallthru
          _
        // Predicated region
        $region49: #{tpu_custom_call.1} parent=11 // pred_check
          %p623 = pneg %p399
        $region50: #{tpu_custom_call.1} parent=11 // pred_check_branch
          %625 = sbr.rel (%p623) target = $region52
        $region51: #{tpu_custom_call.1} parent=11 // pred_region
          _
        $region52: #{tpu_custom_call.1} parent=11 // pred_fallthru
          _
        // Predicated region
        $region53: #{tpu_custom_call.1} parent=11 // pred_check
          %p626 = pneg %p420
        $region54: #{tpu_custom_call.1} parent=11 // pred_check_branch
          %628 = sbr.rel (%p626) target = $region56
        $region55: #{tpu_custom_call.1} parent=11 // pred_region
          _
        $region56: #{tpu_custom_call.1} parent=11 // pred_fallthru
          _
        // Predicated region
        $region57: #{tpu_custom_call.1} parent=11 // pred_check
          %p629 = pneg %p441
        $region58: #{tpu_custom_call.1} parent=11 // pred_check_branch
          %631 = sbr.rel (%p629) target = $region60
        $region59: #{tpu_custom_call.1} parent=11 // pred_region
          _
        $region60: #{tpu_custom_call.1} parent=11 // pred_fallthru
          _
        // Predicated region
        $region61: #{tpu_custom_call.1} parent=11 // pred_check
          %p632 = pneg %p462
        $region62: #{tpu_custom_call.1} parent=11 // pred_check_branch
          %634 = sbr.rel (%p632) target = $region64
        $region63: #{tpu_custom_call.1} parent=11 // pred_region
          _
        $region64: #{tpu_custom_call.1} parent=11 // pred_fallthru
          _
        // Predicated region
        $region65: #{tpu_custom_call.1} parent=11 // pred_check
          %p635 = pneg %p483
        $region66: #{tpu_custom_call.1} parent=11 // pred_check_branch
          %637 = sbr.rel (%p635) target = $region68
        $region67: #{tpu_custom_call.1} parent=11 // pred_region
          _
        $region68: #{tpu_custom_call.1} parent=11 // pred_fallthru
          _
        // Predicated region
        $region69: #{tpu_custom_call.1} parent=11 // pred_check
          %p638 = pneg %p504
        $region70: #{tpu_custom_call.1} parent=11 // pred_check_branch
          %640 = sbr.rel (%p638) target = $region72
        $region71: #{tpu_custom_call.1} parent=11 // pred_region
          _
        $region72: #{tpu_custom_call.1} parent=11 // pred_fallthru
          _
        // Predicated region
        $region73: #{tpu_custom_call.1} parent=11 // pred_check
          %p641 = pneg %p525
        $region74: #{tpu_custom_call.1} parent=11 // pred_check_branch
          %643 = sbr.rel (%p641) target = $region76
        $region75: #{tpu_custom_call.1} parent=11 // pred_region
          _
        $region76: #{tpu_custom_call.1} parent=11 // pred_fallthru
          _
      $region12: #{tpu_custom_call.1} parent=5 // pred_fallthru
        _
      %p644 = scmp.lt.s32.totalorder %s41, 2
      // Predicated region
      $region77: #{tpu_custom_call.1} parent=5 // pred_check
        %p645 = pneg %p644
      $region78: #{tpu_custom_call.1} parent=5 // pred_check_branch
        %647 = sbr.rel (%p645) target = $region80
      $region79: #{tpu_custom_call.1} parent=5 // pred_region
        // Predicated region
        $region81: #{tpu_custom_call.1} parent=79 // pred_check
          %p648 = pneg %p75
        $region82: #{tpu_custom_call.1} parent=79 // pred_check_branch
          %650 = sbr.rel (%p648) target = $region84
        $region83: #{tpu_custom_call.1} parent=79 // pred_region
          %p651 = scmp.lt.s32.totalorder %s48, 1
          %s652 = scalar_select %p651, %s48, 1
          %p653 = scmp.lt.s32.totalorder %s49, 0
          %s654 = scalar_select %p653, %s49, 0
          %s655 = sadd.s32 %s654, %s652
          %s656 = smul.addr %s655, 8
          %s657 = scalar_lea.vmem %s0, %s656
        $region84: #{tpu_custom_call.1} parent=79 // pred_fallthru
          _
        // Predicated region
        $region85: #{tpu_custom_call.1} parent=79 // pred_check
          %p658 = pneg %p101
        $region86: #{tpu_custom_call.1} parent=79 // pred_check_branch
          %660 = sbr.rel (%p658) target = $region88
        $region87: #{tpu_custom_call.1} parent=79 // pred_region
          %p661 = scmp.lt.s32.totalorder %s48, 1
          %s662 = scalar_select %p661, %s48, 1
          %s663 = smul.addr %s662, 4
          %s664 = scalar_lea.vmem %s1, %s663
        $region88: #{tpu_custom_call.1} parent=79 // pred_fallthru
          _
        // Predicated region
        $region89: #{tpu_custom_call.1} parent=79 // pred_check
          %p665 = pneg %p127
        $region90: #{tpu_custom_call.1} parent=79 // pred_check_branch
          %667 = sbr.rel (%p665) target = $region92
        $region91: #{tpu_custom_call.1} parent=79 // pred_region
          %s668 = sand.u32 %s117, 1
          %s669 = scalar_lea.sflag [#allocation3], %s668
          %s670 = sand.u32 %s117, 1
          %s671 = smul.addr %s670, 4
          %s672 = scalar_lea.vmem [#allocation2], %s671
          %s674 = ssub.s32 64, 64
          %675 = vsyncadd %s669, %s674
          %s676 = smul.addr %s48, 64
          %s677 = scalar_lea.hbm %s2, %s676
          %s679 = sshll.u32 %s672, 4
          %s680 = int_to_ptr.vmem [resolvable:$true] %s679
          %682 = dma.hbm_to_vmem [thread:$0]  %s677, 64, %s680, %s669
        $region92: #{tpu_custom_call.1} parent=79 // pred_fallthru
          _
        // Predicated region
        $region93: #{tpu_custom_call.1} parent=79 // pred_check
          %p683 = pneg %p155
        $region94: #{tpu_custom_call.1} parent=79 // pred_check_branch
          %685 = sbr.rel (%p683) target = $region96
        $region95: #{tpu_custom_call.1} parent=79 // pred_region
          %s686 = sand.u32 %s145, 1
          %s687 = scalar_lea.sflag [#allocation6], %s686
          %s688 = sand.u32 %s145, 1
          %s689 = smul.addr %s688, 4
          %s690 = scalar_lea.vmem [#allocation5], %s689
          %s692 = ssub.s32 64, 64
          %693 = vsyncadd %s687, %s692
          %s694 = sadd.s32 %s49, %s48
          %s695 = smul.addr %s694, 64
          %s696 = scalar_lea.hbm %s3, %s695
          %s698 = sshll.u32 %s690, 4
          %s699 = int_to_ptr.vmem [resolvable:$true] %s698
          %701 = dma.hbm_to_vmem [thread:$0]  %s696, 64, %s699, %s687
        $region96: #{tpu_custom_call.1} parent=79 // pred_fallthru
          _
        // Predicated region
        $region97: #{tpu_custom_call.1} parent=79 // pred_check
          %p702 = pneg %p183
        $region98: #{tpu_custom_call.1} parent=79 // pred_check_branch
          %704 = sbr.rel (%p702) target = $region100
        $region99: #{tpu_custom_call.1} parent=79 // pred_region
          %p705 = scmp.lt.s32.totalorder %s48, 1
          %s706 = scalar_select %p705, %s48, 1
          %p707 = scmp.lt.s32.totalorder %s49, 0
          %s708 = scalar_select %p707, %s49, 0
          %s709 = sadd.s32 %s708, %s706
          %s710 = smul.addr %s709, 4
          %s711 = scalar_lea.vmem %s4, %s710
        $region100: #{tpu_custom_call.1} parent=79 // pred_fallthru
          _
      $region80: #{tpu_custom_call.1} parent=5 // pred_fallthru
        _
      %p712 = scmp.le.s32.totalorder 1, %s41
      %p713 = scmp.lt.s32.totalorder %s41, 3
      %p714 = pnand %p712, %p713
      %p715 = pneg %p714
      // Predicated region
      $region101: #{tpu_custom_call.1} parent=5 // pred_check
        _
      $region102: #{tpu_custom_call.1} parent=5 // pred_check_branch
        %717 = sbr.rel (%p714) target = $region104
      $region103: #{tpu_custom_call.1} parent=5 // pred_region
        %s718 = ssub.s32 %s41, 1
        %s719 = sand.u32 %s120, 1
        %s720 = scalar_lea.sflag [#allocation3], %s719
        %s721 = sand.u32 %s120, 1
        %s722 = smul.addr %s721, 4
        %s723 = scalar_lea.vmem [#allocation2], %s722
        // Predicated region
        $region105: #{tpu_custom_call.1} parent=103 // pred_check
          %p724 = pneg %p133
        $region106: #{tpu_custom_call.1} parent=103 // pred_check_branch
          %726 = sbr.rel (%p724) target = $region108
        $region107: #{tpu_custom_call.1} parent=103 // pred_region
          %727 = dma.done %s720, 64
        $region108: #{tpu_custom_call.1} parent=103 // pred_fallthru
          _
        %s728 = sand.u32 %s148, 1
        %s729 = scalar_lea.sflag [#allocation6], %s728
        %s730 = sand.u32 %s148, 1
        %s731 = smul.addr %s730, 4
        %s732 = scalar_lea.vmem [#allocation5], %s731
        // Predicated region
        $region109: #{tpu_custom_call.1} parent=103 // pred_check
          %p733 = pneg %p161
        $region110: #{tpu_custom_call.1} parent=103 // pred_check_branch
          %735 = sbr.rel (%p733) target = $region112
        $region111: #{tpu_custom_call.1} parent=103 // pred_region
          %736 = dma.done %s729, 64
        $region112: #{tpu_custom_call.1} parent=103 // pred_fallthru
          _
        %p737 = scmp.lt.s32.totalorder %s50, 1
        %s738 = scalar_select %p737, %s50, 1
        %p739 = scmp.lt.s32.totalorder %s51, 0
        %s740 = scalar_select %p739, %s51, 0
        %s741 = sadd.s32 %s740, %s738
        %s742 = smul.addr %s741, 8
        %s743 = scalar_lea.vmem %s0, %s742
        %p744 = pneg %p81
        %p745 = pneg %p78
        %p746 = scmp.lt.s32.totalorder %s50, 1
        %s747 = scalar_select %p746, %s50, 1
        %s748 = smul.addr %s747, 4
        %s749 = scalar_lea.vmem %s1, %s748
        %p750 = pneg %p107
        %p751 = pneg %p104
        %s752 = sand.u32 %s120, 1
        %s753 = scalar_lea.sflag [#allocation3], %s752
        %s754 = sand.u32 %s120, 1
        %s755 = smul.addr %s754, 4
        %s756 = scalar_lea.vmem [#allocation2], %s755
        %p757 = pneg %p133
        %p758 = pneg %p130
        %s759 = sand.u32 %s148, 1
        %s760 = scalar_lea.sflag [#allocation6], %s759
        %s761 = sand.u32 %s148, 1
        %s762 = smul.addr %s761, 4
        %s763 = scalar_lea.vmem [#allocation5], %s762
        %p764 = pneg %p161
        %p765 = pneg %p158
        %p766 = scmp.lt.s32.totalorder %s50, 1
        %s767 = scalar_select %p766, %s50, 1
        %p768 = scmp.lt.s32.totalorder %s51, 0
        %s769 = scalar_select %p768, %s51, 0
        %s770 = sadd.s32 %s769, %s767
        %s771 = smul.addr %s770, 4
        %s772 = scalar_lea.vmem %s4, %s771
        %p773 = pneg %p189
        %p774 = pneg %p186
        %p775 = pneg %p210
        %p776 = pneg %p207
        %p777 = pneg %p231
        %p778 = pneg %p228
        %p779 = pneg %p252
        %p780 = pneg %p249
        %p781 = pneg %p273
        %p782 = pneg %p270
        %p783 = pneg %p294
        %p784 = pneg %p291
        %p785 = pneg %p315
        %p786 = pneg %p312
        %p787 = pneg %p336
        %p788 = pneg %p333
        %p789 = pneg %p357
        %p790 = pneg %p354
        %p791 = pneg %p378
        %p792 = pneg %p375
        %p793 = pneg %p399
        %p794 = pneg %p396
        %p795 = pneg %p420
        %p796 = pneg %p417
        %p797 = pneg %p441
        %p798 = pneg %p438
        %p799 = pneg %p462
        %p800 = pneg %p459
        %p801 = pneg %p483
        %p802 = pneg %p480
        %p803 = pneg %p504
        %p804 = pneg %p501
        %p805 = pneg %p525
        %p806 = pneg %p522
        %p807 = pneg %p553
        %p808 = pneg %p550
        %s809 = sand.u32 %s540, 1
        %s810 = scalar_lea.sflag [#allocation4], %s809
        %s811 = sand.u32 %s540, 1
        %s812 = smul.addr %s811, 8
        %s813 = scalar_lea.vmem [#allocation7], %s812
        %p814 = pneg %p581
        %p815 = pneg %p578
        %s816 = sand.u32 %s568, 1
        %s817 = scalar_lea.sflag [#allocation9], %s816
        %s818 = sand.u32 %s568, 1
        %s819 = smul.addr %s818, 8
        %s820 = scalar_lea.vmem [#allocation8], %s819
        %p821 = scmp.lt.s32.totalorder %s50, 1
        %s822 = scalar_select %p821, %s50, 1
        %p823 = scmp.lt.s32.totalorder %s51, 0
        %s824 = scalar_select %p823, %s51, 0
        %s825 = sadd.s32 %s824, %s822
        %s826 = smul.addr %s825, 8
        %s827 = scalar_lea.vmem %s0, %s826
        %p828 = scmp.lt.s32.totalorder %s50, 1
        %s829 = scalar_select %p828, %s50, 1
        %s830 = smul.addr %s829, 4
        %s831 = scalar_lea.vmem %s1, %s830
        %p832 = scmp.lt.s32.totalorder %s50, 1
        %s833 = scalar_select %p832, %s50, 1
        %p834 = scmp.lt.s32.totalorder %s51, 0
        %s835 = scalar_select %p834, %s51, 0
        %s836 = sadd.s32 %s835, %s833
        %s837 = smul.addr %s836, 4
        %s838 = scalar_lea.vmem %s4, %s837
        %v840 = vld [vmem:[%s827] sm:$0xff]
        %v841 = vld [vmem:[%s831] sm:$0xf]
        %v842 = vld [vmem:[%s723] sm:$0xf]
        %v843 = vld [vmem:[%s732] sm:$0xf]
        %v844 = vunpack.c.l.bf16 %v843
        %v845 = vld [vmem:[%s838] sm:$0xf]
        %v846 = vunpack.c.l.bf16 %v845
        %v847 = vld [vmem:[%s13] sm:$0x1]
        %v848 = vld [vmem:[%s14] sm:$0x1]
        %vm849 = vcmask 261120
        %v850 = vsel %vm849, %v840, 0.0
        %851 = vadd.xlane.f32.xlu0 %v850
        %v852 = vpop.xlane.xlu0 %851
        %v853 = vrcp.pop 32.0
        %v854 = vmul.f32 %v852, %v853
        %v855 = vsub.f32 %v840, %v854
        %v856 = vmul.f32 %v855, %v855
        %v857 = vsel %vm849, %v856, 0.0
        %858 = vadd.xlane.f32.xlu0 %v857
        %v859 = vpop.xlane.xlu0 %858
        %v860 = vmul.f32 %v859, %v853
        %v861 = vadd.f32 %v860, 1e-06
        %v862 = vrsqrt.pop %v861
        %v863 = vmul.f32 %v855, %v862
        %v865 = vlaneseq
        %v866 = vshrl.u32 %v865, 7
        %v867 = vsub.s32 0, %v866
        %v868 = vrot.slane %v847, %v867
        %v870 = vmul.f32 %v863, %v868
        %v872 = vlaneseq
        %v873 = vshrl.u32 %v872, 7
        %v874 = vsub.s32 0, %v873
        %v875 = vrot.slane %v848, %v874
        %v877 = vadd.f32 %v870, %v875
        %v878 = vpack.c.bf16 %v877, %v877
        %v879 = vld [vmem:[%s5] sm:$0xf]
        %v880 = vld [vmem:[%s5 + $0x4] sm:$0xf]
        %v881 = vld [vmem:[%s5 + $0x8] sm:$0xf]
        %v882 = vld [vmem:[%s5 + $0xc] sm:$0xf]
        %v883 = vld [vmem:[%s6] sm:$0x1]
        %v885 = vlaneseq
        %v886 = vshrl.u32 %v885, 7
        %v887 = vsub.s32 0, %v886
        %v888 = vrot.slane %v883, %v887
        %v894 = vunpack.c.l.b16 %v879
        %v895 = vunpack.c.l.b16 %v880
        %v896 = vunpack.c.l.b16 %v881
        %v897 = vunpack.c.l.b16 %v882
        %v898 = vpack.c.b16 %v895, %v894
        %v899 = vpack.c.b16 %v897, %v896
        %v903 = vsel %vm849, %v878, 0
        %905 = vmatprep.subr.bf16.mxu0 0
        %906 = vmatpush1.bf16.msra.mxu0 0
        %907 = vmatprep.subr.bf16.mxu0 0
        %908 = vmatpush1.bf16.msra.mxu0 0
        %909 = vmatprep.subr.bf16.mxu0 0
        %910 = vmatpush1.bf16.msra.mxu0 0
        %911 = vmatprep.subr.bf16.mxu0 0
        %912 = vmatpush1.bf16.msra.mxu0 0
        %913 = vmatprep.subr.bf16.mxu0 0
        %914 = vmatpush1.bf16.msra.mxu0 0
        %915 = vmatprep.subr.bf16.mxu0 0
        %916 = vmatpush1.bf16.msra.mxu0 0
        %917 = vmatprep.subr.bf16.mxu0 0
        %918 = vmatpush1.bf16.msra.mxu0 %v899
        %919 = vmatprep.subr.bf16.mxu0 0
        %920 = vmatpush1.bf16.msra.mxu0 %v898
        %921 = vmatprep.subr.bf16.mxu0 0
        %922 = vmatpush2.bf16.msra.mxu0 0
        %923 = vmatprep.subr.bf16.mxu0 0
        %924 = vmatpush2.bf16.msra.mxu0 0
        %925 = vmatprep.subr.bf16.mxu0 0
        %926 = vmatpush2.bf16.msra.mxu0 0
        %927 = vmatprep.subr.bf16.mxu0 0
        %928 = vmatpush2.bf16.msra.mxu0 0
        %929 = vmatprep.subr.bf16.mxu0 0
        %930 = vmatpush2.bf16.msra.mxu0 0
        %931 = vmatprep.subr.bf16.mxu0 0
        %932 = vmatpush2.bf16.msra.mxu0 0
        %933 = vmatprep.subr.bf16.mxu0 0
        %934 = vmatpush2.bf16.msra.mxu0 0
        %935 = vmatprep.subr.bf16.mxu0 0
        %936 = vmatpush2.bf16.msra.mxu0 0
        %937 = vmatprep.mubr.bf16.mxu0 0
        %938 = vmatmul.mubr.bf16.gmra.mxu0 %v903
        %v939 = vpop.f32.mrf.mxu0
        %v940 = vadd.f32 %v888, %v939
        %v941 = vpop.f32.mrf.mxu0
        %v942 = vpop.f32.mrf.mxu0
        %v943 = vpop.f32.mrf.mxu0
        %944 = vdwg.mxu0
        %v945 = vld [vmem:[%s7] sm:$0xf]
        %v946 = vld [vmem:[%s7 + $0x4] sm:$0xf]
        %v947 = vld [vmem:[%s7 + $0x8] sm:$0xf]
        %v948 = vld [vmem:[%s7 + $0xc] sm:$0xf]
        %v949 = vld [vmem:[%s8] sm:$0x1]
        %v951 = vlaneseq
        %v952 = vshrl.u32 %v951, 7
        %v953 = vsub.s32 0, %v952
        %v954 = vrot.slane %v949, %v953
        %v960 = vunpack.c.l.b16 %v945
        %v961 = vunpack.c.l.b16 %v946
        %v962 = vunpack.c.l.b16 %v947
        %v963 = vunpack.c.l.b16 %v948
        %v964 = vpack.c.b16 %v961, %v960
        %v965 = vpack.c.b16 %v963, %v962
        %v969 = vsel %vm849, %v841, 0
        %971 = vmatprep.subr.bf16.mxu0 0
        %972 = vmatpush1.bf16.msra.mxu0 0
        %973 = vmatprep.subr.bf16.mxu0 0
        %974 = vmatpush1.bf16.msra.mxu0 0
        %975 = vmatprep.subr.bf16.mxu0 0
        %976 = vmatpush1.bf16.msra.mxu0 0
        %977 = vmatprep.subr.bf16.mxu0 0
        %978 = vmatpush1.bf16.msra.mxu0 0
        %979 = vmatprep.subr.bf16.mxu0 0
        %980 = vmatpush1.bf16.msra.mxu0 0
        %981 = vmatprep.subr.bf16.mxu0 0
        %982 = vmatpush1.bf16.msra.mxu0 0
        %983 = vmatprep.subr.bf16.mxu0 0
        %984 = vmatpush1.bf16.msra.mxu0 %v965
        %985 = vmatprep.subr.bf16.mxu0 0
        %986 = vmatpush1.bf16.msra.mxu0 %v964
        %987 = vmatprep.subr.bf16.mxu0 0
        %988 = vmatpush2.bf16.msra.mxu0 0
        %989 = vmatprep.subr.bf16.mxu0 0
        %990 = vmatpush2.bf16.msra.mxu0 0
        %991 = vmatprep.subr.bf16.mxu0 0
        %992 = vmatpush2.bf16.msra.mxu0 0
        %993 = vmatprep.subr.bf16.mxu0 0
        %994 = vmatpush2.bf16.msra.mxu0 0
        %995 = vmatprep.subr.bf16.mxu0 0
        %996 = vmatpush2.bf16.msra.mxu0 0
        %997 = vmatprep.subr.bf16.mxu0 0
        %998 = vmatpush2.bf16.msra.mxu0 0
        %999 = vmatprep.subr.bf16.mxu0 0
        %1000 = vmatpush2.bf16.msra.mxu0 0
        %1001 = vmatprep.subr.bf16.mxu0 0
        %1002 = vmatpush2.bf16.msra.mxu0 0
        %1003 = vmatprep.mubr.bf16.mxu0 0
        %1004 = vmatmul.mubr.bf16.gmra.mxu0 %v969
        %v1005 = vpop.f32.mrf.mxu0
        %v1006 = vadd.f32 %v954, %v1005
        %v1007 = vpop.f32.mrf.mxu0
        %v1008 = vpop.f32.mrf.mxu0
        %v1009 = vpop.f32.mrf.mxu0
        %1010 = vdwg.mxu0
        %v1011 = vld [vmem:[%s9] sm:$0xf]
        %v1012 = vld [vmem:[%s9 + $0x4] sm:$0xf]
        %v1013 = vld [vmem:[%s9 + $0x8] sm:$0xf]
        %v1014 = vld [vmem:[%s9 + $0xc] sm:$0xf]
        %v1015 = vld [vmem:[%s10] sm:$0x1]
        %v1017 = vlaneseq
        %v1018 = vshrl.u32 %v1017, 7
        %v1019 = vsub.s32 0, %v1018
        %v1020 = vrot.slane %v1015, %v1019
        %v1026 = vunpack.c.l.b16 %v1011
        %v1027 = vunpack.c.l.b16 %v1012
        %v1028 = vunpack.c.l.b16 %v1013
        %v1029 = vunpack.c.l.b16 %v1014
        %v1030 = vpack.c.b16 %v1027, %v1026
        %v1031 = vpack.c.b16 %v1029, %v1028
        %v1035 = vsel %vm849, %v842, 0
        %1037 = vmatprep.subr.bf16.mxu0 0
        %1038 = vmatpush1.bf16.msra.mxu0 0
        %1039 = vmatprep.subr.bf16.mxu0 0
        %1040 = vmatpush1.bf16.msra.mxu0 0
        %1041 = vmatprep.subr.bf16.mxu0 0
        %1042 = vmatpush1.bf16.msra.mxu0 0
        %1043 = vmatprep.subr.bf16.mxu0 0
        %1044 = vmatpush1.bf16.msra.mxu0 0
        %1045 = vmatprep.subr.bf16.mxu0 0
        %1046 = vmatpush1.bf16.msra.mxu0 0
        %1047 = vmatprep.subr.bf16.mxu0 0
        %1048 = vmatpush1.bf16.msra.mxu0 0
        %1049 = vmatprep.subr.bf16.mxu0 0
        %1050 = vmatpush1.bf16.msra.mxu0 %v1031
        %1051 = vmatprep.subr.bf16.mxu0 0
        %1052 = vmatpush1.bf16.msra.mxu0 %v1030
        %1053 = vmatprep.subr.bf16.mxu0 0
        %1054 = vmatpush2.bf16.msra.mxu0 0
        %1055 = vmatprep.subr.bf16.mxu0 0
        %1056 = vmatpush2.bf16.msra.mxu0 0
        %1057 = vmatprep.subr.bf16.mxu0 0
        %1058 = vmatpush2.bf16.msra.mxu0 0
        %1059 = vmatprep.subr.bf16.mxu0 0
        %1060 = vmatpush2.bf16.msra.mxu0 0
        %1061 = vmatprep.subr.bf16.mxu0 0
        %1062 = vmatpush2.bf16.msra.mxu0 0
        %1063 = vmatprep.subr.bf16.mxu0 0
        %1064 = vmatpush2.bf16.msra.mxu0 0
        %1065 = vmatprep.subr.bf16.mxu0 0
        %1066 = vmatpush2.bf16.msra.mxu0 0
        %1067 = vmatprep.subr.bf16.mxu0 0
        %1068 = vmatpush2.bf16.msra.mxu0 0
        %1069 = vmatprep.mubr.bf16.mxu0 0
        %1070 = vmatmul.mubr.bf16.gmra.mxu0 %v1035
        %v1071 = vpop.f32.mrf.mxu0
        %v1072 = vadd.f32 %v1020, %v1071
        %v1073 = vpop.f32.mrf.mxu0
        %v1074 = vpop.f32.mrf.mxu0
        %v1075 = vpop.f32.mrf.mxu0
        %1076 = vdwg.mxu0
        %v1077 = vpack.c.bf16 %v940, %v940
        %1079 = vrot.lane.b32.xlu0 %v1077, 112
        %v1080 = vpop.permute.xlu0 %1079
        %v1082 = vunpack.c.l.s4 1983009808
        %v1083 = vunpack.c.0.s8 %v1082
        %v1084 = vlaneseq
        %v1085 = vshrl.u32 %v1084, 7
        %v1086 = vsub.s32 %v1083, %v1085
        %v1087 = vrot.slane %v1077, %v1086
        %v1088 = vcombine.high %v1087, 0
        %v1090 = vunpack.c.l.s4 1934713408
        %v1091 = vunpack.c.0.s8 %v1090
        %v1092 = vlaneseq
        %v1093 = vshrl.u32 %v1092, 7
        %v1094 = vsub.s32 %v1091, %v1093
        %v1095 = vrot.slane %v1087, %v1094
        %v1097 = vunpack.c.l.s4 1934713408
        %v1098 = vunpack.c.0.s8 %v1097
        %v1099 = vlaneseq
        %v1100 = vshrl.u32 %v1099, 7
        %v1101 = vsub.s32 %v1098, %v1100
        %v1102 = vrot.slane %v1088, %v1101
        %v1103 = vcombine.high %v1095, 0
        %v1104 = vcombine.high %v1102, 0
        %v1107 = vunpack.c.l.s4 1983009808
        %v1108 = vunpack.c.0.s8 %v1107
        %v1109 = vlaneseq
        %v1110 = vshrl.u32 %v1109, 7
        %v1111 = vsub.s32 %v1108, %v1110
        %v1112 = vrot.slane %v1080, %v1111
        %v1113 = vcombine.high %v1112, 0
        %v1115 = vunpack.c.l.s4 1934713408
        %v1116 = vunpack.c.0.s8 %v1115
        %v1117 = vlaneseq
        %v1118 = vshrl.u32 %v1117, 7
        %v1119 = vsub.s32 %v1116, %v1118
        %v1120 = vrot.slane %v1112, %v1119
        %v1122 = vunpack.c.l.s4 1934713408
        %v1123 = vunpack.c.0.s8 %v1122
        %v1124 = vlaneseq
        %v1125 = vshrl.u32 %v1124, 7
        %v1126 = vsub.s32 %v1123, %v1125
        %v1127 = vrot.slane %v1113, %v1126
        %v1128 = vcombine.high %v1120, 0
        %v1129 = vcombine.high %v1127, 0
        %v1132 = vpack.i.b16 %v1120, %v1095
        %v1134 = vshrl.u32 %v1095, 16
        %v1135 = vshrl.u32 %v1120, 16
        %v1136 = vpack.i.b16 %v1135, %v1134
        %v1140 = vpack.i.b16 %v1128, %v1103
        %v1142 = vshrl.u32 %v1103, 16
        %v1143 = vshrl.u32 %v1128, 16
        %v1144 = vpack.i.b16 %v1143, %v1142
        %v1148 = vpack.i.b16 %v1127, %v1102
        %v1150 = vshrl.u32 %v1102, 16
        %v1151 = vshrl.u32 %v1127, 16
        %v1152 = vpack.i.b16 %v1151, %v1150
        %v1156 = vpack.i.b16 %v1129, %v1104
        %v1158 = vshrl.u32 %v1104, 16
        %v1159 = vshrl.u32 %v1129, 16
        %v1160 = vpack.i.b16 %v1159, %v1158
        %v1162 = vcombine.low %v1132, %v1148
        %v1164 = vunpack.c.l.s4 1983009808
        %v1165 = vunpack.c.0.s8 %v1164
        %v1166 = vlaneseq
        %v1167 = vshrl.u32 %v1166, 7
        %v1168 = vsub.s32 %v1165, %v1167
        %v1169 = vrot.slane %v1162, %v1168
        %v1170 = vcombine.low %v1140, %v1156
        %v1172 = vunpack.c.l.s4 1983009808
        %v1173 = vunpack.c.0.s8 %v1172
        %v1174 = vlaneseq
        %v1175 = vshrl.u32 %v1174, 7
        %v1176 = vsub.s32 %v1173, %v1175
        %v1177 = vrot.slane %v1170, %v1176
        %v1178 = vcombine.low %v1169, %v1177
        %v1180 = vunpack.c.l.s4 1934713408
        %v1181 = vunpack.c.0.s8 %v1180
        %v1182 = vlaneseq
        %v1183 = vshrl.u32 %v1182, 7
        %v1184 = vsub.s32 %v1181, %v1183
        %v1185 = vrot.slane %v1178, %v1184
        %v1186 = vcombine.low %v1136, %v1152
        %v1188 = vunpack.c.l.s4 1983009808
        %v1189 = vunpack.c.0.s8 %v1188
        %v1190 = vlaneseq
        %v1191 = vshrl.u32 %v1190, 7
        %v1192 = vsub.s32 %v1189, %v1191
        %v1193 = vrot.slane %v1186, %v1192
        %v1194 = vcombine.low %v1144, %v1160
        %v1196 = vunpack.c.l.s4 1983009808
        %v1197 = vunpack.c.0.s8 %v1196
        %v1198 = vlaneseq
        %v1199 = vshrl.u32 %v1198, 7
        %v1200 = vsub.s32 %v1197, %v1199
        %v1201 = vrot.slane %v1194, %v1200
        %v1202 = vcombine.low %v1193, %v1201
        %v1204 = vunpack.c.l.s4 1934713408
        %v1205 = vunpack.c.0.s8 %v1204
        %v1206 = vlaneseq
        %v1207 = vshrl.u32 %v1206, 7
        %v1208 = vsub.s32 %v1205, %v1207
        %v1209 = vrot.slane %v1202, %v1208
        %v1212 = vpack.i.b16 %v1209, %v1185
        %v1213 = vshrl.u32 %v1185, 16
        %v1214 = vshrl.u32 %v1209, 16
        %v1215 = vpack.i.b16 %v1214, %v1213
        %v1216 = vpack.c.bf16 %v1006, %v1006
        %1218 = vrot.lane.b32.xlu0 %v1216, 112
        %v1219 = vpop.permute.xlu0 %1218
        %v1221 = vunpack.c.l.s4 1983009808
        %v1222 = vunpack.c.0.s8 %v1221
        %v1223 = vlaneseq
        %v1224 = vshrl.u32 %v1223, 7
        %v1225 = vsub.s32 %v1222, %v1224
        %v1226 = vrot.slane %v1216, %v1225
        %v1227 = vcombine.high %v1226, 0
        %v1229 = vunpack.c.l.s4 1934713408
        %v1230 = vunpack.c.0.s8 %v1229
        %v1231 = vlaneseq
        %v1232 = vshrl.u32 %v1231, 7
        %v1233 = vsub.s32 %v1230, %v1232
        %v1234 = vrot.slane %v1226, %v1233
        %v1236 = vunpack.c.l.s4 1934713408
        %v1237 = vunpack.c.0.s8 %v1236
        %v1238 = vlaneseq
        %v1239 = vshrl.u32 %v1238, 7
        %v1240 = vsub.s32 %v1237, %v1239
        %v1241 = vrot.slane %v1227, %v1240
        %v1242 = vcombine.high %v1234, 0
        %v1243 = vcombine.high %v1241, 0
        %v1246 = vunpack.c.l.s4 1983009808
        %v1247 = vunpack.c.0.s8 %v1246
        %v1248 = vlaneseq
        %v1249 = vshrl.u32 %v1248, 7
        %v1250 = vsub.s32 %v1247, %v1249
        %v1251 = vrot.slane %v1219, %v1250
        %v1252 = vcombine.high %v1251, 0
        %v1254 = vunpack.c.l.s4 1934713408
        %v1255 = vunpack.c.0.s8 %v1254
        %v1256 = vlaneseq
        %v1257 = vshrl.u32 %v1256, 7
        %v1258 = vsub.s32 %v1255, %v1257
        %v1259 = vrot.slane %v1251, %v1258
        %v1261 = vunpack.c.l.s4 1934713408
        %v1262 = vunpack.c.0.s8 %v1261
        %v1263 = vlaneseq
        %v1264 = vshrl.u32 %v1263, 7
        %v1265 = vsub.s32 %v1262, %v1264
        %v1266 = vrot.slane %v1252, %v1265
        %v1267 = vcombine.high %v1259, 0
        %v1268 = vcombine.high %v1266, 0
        %v1271 = vpack.i.b16 %v1259, %v1234
        %v1273 = vshrl.u32 %v1234, 16
        %v1274 = vshrl.u32 %v1259, 16
        %v1275 = vpack.i.b16 %v1274, %v1273
        %v1279 = vpack.i.b16 %v1267, %v1242
        %v1281 = vshrl.u32 %v1242, 16
        %v1282 = vshrl.u32 %v1267, 16
        %v1283 = vpack.i.b16 %v1282, %v1281
        %v1287 = vpack.i.b16 %v1266, %v1241
        %v1289 = vshrl.u32 %v1241, 16
        %v1290 = vshrl.u32 %v1266, 16
        %v1291 = vpack.i.b16 %v1290, %v1289
        %v1295 = vpack.i.b16 %v1268, %v1243
        %v1297 = vshrl.u32 %v1243, 16
        %v1298 = vshrl.u32 %v1268, 16
        %v1299 = vpack.i.b16 %v1298, %v1297
        %v1301 = vcombine.low %v1271, %v1287
        %v1303 = vunpack.c.l.s4 1983009808
        %v1304 = vunpack.c.0.s8 %v1303
        %v1305 = vlaneseq
        %v1306 = vshrl.u32 %v1305, 7
        %v1307 = vsub.s32 %v1304, %v1306
        %v1308 = vrot.slane %v1301, %v1307
        %v1309 = vcombine.low %v1279, %v1295
        %v1311 = vunpack.c.l.s4 1983009808
        %v1312 = vunpack.c.0.s8 %v1311
        %v1313 = vlaneseq
        %v1314 = vshrl.u32 %v1313, 7
        %v1315 = vsub.s32 %v1312, %v1314
        %v1316 = vrot.slane %v1309, %v1315
        %v1317 = vcombine.low %v1308, %v1316
        %v1319 = vunpack.c.l.s4 1934713408
        %v1320 = vunpack.c.0.s8 %v1319
        %v1321 = vlaneseq
        %v1322 = vshrl.u32 %v1321, 7
        %v1323 = vsub.s32 %v1320, %v1322
        %v1324 = vrot.slane %v1317, %v1323
        %v1325 = vcombine.low %v1275, %v1291
        %v1327 = vunpack.c.l.s4 1983009808
        %v1328 = vunpack.c.0.s8 %v1327
        %v1329 = vlaneseq
        %v1330 = vshrl.u32 %v1329, 7
        %v1331 = vsub.s32 %v1328, %v1330
        %v1332 = vrot.slane %v1325, %v1331
        %v1333 = vcombine.low %v1283, %v1299
        %v1335 = vunpack.c.l.s4 1983009808
        %v1336 = vunpack.c.0.s8 %v1335
        %v1337 = vlaneseq
        %v1338 = vshrl.u32 %v1337, 7
        %v1339 = vsub.s32 %v1336, %v1338
        %v1340 = vrot.slane %v1333, %v1339
        %v1341 = vcombine.low %v1332, %v1340
        %v1343 = vunpack.c.l.s4 1934713408
        %v1344 = vunpack.c.0.s8 %v1343
        %v1345 = vlaneseq
        %v1346 = vshrl.u32 %v1345, 7
        %v1347 = vsub.s32 %v1344, %v1346
        %v1348 = vrot.slane %v1341, %v1347
        %v1351 = vpack.i.b16 %v1348, %v1324
        %v1352 = vshrl.u32 %v1324, 16
        %v1353 = vshrl.u32 %v1348, 16
        %v1354 = vpack.i.b16 %v1353, %v1352
        %v1355 = vpack.c.bf16 %v1072, %v1072
        %1357 = vrot.lane.b32.xlu0 %v1355, 96
        %v1358 = vpop.permute.xlu0 %1357
        %v1360 = vunpack.c.l.s4 1983009808
        %v1361 = vunpack.c.0.s8 %v1360
        %v1362 = vlaneseq
        %v1363 = vshrl.u32 %v1362, 7
        %v1364 = vsub.s32 %v1361, %v1363
        %v1365 = vrot.slane %v1355, %v1364
        %v1366 = vcombine.high %v1365, 0
        %v1368 = vunpack.c.l.s4 1934713408
        %v1369 = vunpack.c.0.s8 %v1368
        %v1370 = vlaneseq
        %v1371 = vshrl.u32 %v1370, 7
        %v1372 = vsub.s32 %v1369, %v1371
        %v1373 = vrot.slane %v1365, %v1372
        %v1375 = vunpack.c.l.s4 1934713408
        %v1376 = vunpack.c.0.s8 %v1375
        %v1377 = vlaneseq
        %v1378 = vshrl.u32 %v1377, 7
        %v1379 = vsub.s32 %v1376, %v1378
        %v1380 = vrot.slane %v1366, %v1379
        %v1381 = vcombine.high %v1373, 0
        %v1382 = vcombine.high %v1380, 0
        %v1385 = vunpack.c.l.s4 1983009808
        %v1386 = vunpack.c.0.s8 %v1385
        %v1387 = vlaneseq
        %v1388 = vshrl.u32 %v1387, 7
        %v1389 = vsub.s32 %v1386, %v1388
        %v1390 = vrot.slane %v1358, %v1389
        %v1391 = vcombine.high %v1390, 0
        %v1393 = vunpack.c.l.s4 1934713408
        %v1394 = vunpack.c.0.s8 %v1393
        %v1395 = vlaneseq
        %v1396 = vshrl.u32 %v1395, 7
        %v1397 = vsub.s32 %v1394, %v1396
        %v1398 = vrot.slane %v1390, %v1397
        %v1400 = vunpack.c.l.s4 1934713408
        %v1401 = vunpack.c.0.s8 %v1400
        %v1402 = vlaneseq
        %v1403 = vshrl.u32 %v1402, 7
        %v1404 = vsub.s32 %v1401, %v1403
        %v1405 = vrot.slane %v1391, %v1404
        %v1406 = vcombine.high %v1398, 0
        %v1407 = vcombine.high %v1405, 0
        %v1410 = vpack.i.b16 %v1398, %v1373
        %v1412 = vshrl.u32 %v1373, 16
        %v1413 = vshrl.u32 %v1398, 16
        %v1414 = vpack.i.b16 %v1413, %v1412
        %v1418 = vpack.i.b16 %v1406, %v1381
        %v1420 = vshrl.u32 %v1381, 16
        %v1421 = vshrl.u32 %v1406, 16
        %v1422 = vpack.i.b16 %v1421, %v1420
        %v1426 = vpack.i.b16 %v1405, %v1380
        %v1428 = vshrl.u32 %v1380, 16
        %v1429 = vshrl.u32 %v1405, 16
        %v1430 = vpack.i.b16 %v1429, %v1428
        %v1434 = vpack.i.b16 %v1407, %v1382
        %v1436 = vshrl.u32 %v1382, 16
        %v1437 = vshrl.u32 %v1407, 16
        %v1438 = vpack.i.b16 %v1437, %v1436
        %v1440 = vcombine.low %v1410, %v1426
        %v1442 = vunpack.c.l.s4 1983009808
        %v1443 = vunpack.c.0.s8 %v1442
        %v1444 = vlaneseq
        %v1445 = vshrl.u32 %v1444, 7
        %v1446 = vsub.s32 %v1443, %v1445
        %v1447 = vrot.slane %v1440, %v1446
        %v1448 = vcombine.low %v1418, %v1434
        %v1450 = vunpack.c.l.s4 1983009808
        %v1451 = vunpack.c.0.s8 %v1450
        %v1452 = vlaneseq
        %v1453 = vshrl.u32 %v1452, 7
        %v1454 = vsub.s32 %v1451, %v1453
        %v1455 = vrot.slane %v1448, %v1454
        %v1456 = vcombine.low %v1447, %v1455
        %v1458 = vunpack.c.l.s4 1934713408
        %v1459 = vunpack.c.0.s8 %v1458
        %v1460 = vlaneseq
        %v1461 = vshrl.u32 %v1460, 7
        %v1462 = vsub.s32 %v1459, %v1461
        %v1463 = vrot.slane %v1456, %v1462
        %v1464 = vcombine.low %v1414, %v1430
        %v1466 = vunpack.c.l.s4 1983009808
        %v1467 = vunpack.c.0.s8 %v1466
        %v1468 = vlaneseq
        %v1469 = vshrl.u32 %v1468, 7
        %v1470 = vsub.s32 %v1467, %v1469
        %v1471 = vrot.slane %v1464, %v1470
        %v1472 = vcombine.low %v1422, %v1438
        %v1474 = vunpack.c.l.s4 1983009808
        %v1475 = vunpack.c.0.s8 %v1474
        %v1476 = vlaneseq
        %v1477 = vshrl.u32 %v1476, 7
        %v1478 = vsub.s32 %v1475, %v1477
        %v1479 = vrot.slane %v1472, %v1478
        %v1480 = vcombine.low %v1471, %v1479
        %v1482 = vunpack.c.l.s4 1934713408
        %v1483 = vunpack.c.0.s8 %v1482
        %v1484 = vlaneseq
        %v1485 = vshrl.u32 %v1484, 7
        %v1486 = vsub.s32 %v1483, %v1485
        %v1487 = vrot.slane %v1480, %v1486
        %v1490 = vpack.i.b16 %v1487, %v1463
        %v1491 = vshrl.u32 %v1463, 16
        %v1492 = vshrl.u32 %v1487, 16
        %v1493 = vpack.i.b16 %v1492, %v1491
        %vm1494 = vcmask 130048
        %v1496 = vsel %vm1494, %v1212, 0
        %v1499 = vsel %vm1494, %v1351, 0
        %1501 = vmatprep.subr.bf16.mxu0 0
        %1502 = vmatpush1.bf16.xpose.msra.mxu0 0
        %1503 = vmatprep.subr.bf16.mxu0 0
        %1504 = vmatpush1.bf16.xpose.msra.mxu0 0
        %1505 = vmatprep.subr.bf16.mxu0 0
        %1506 = vmatpush1.bf16.xpose.msra.mxu0 0
        %1507 = vmatprep.subr.bf16.mxu0 0
        %1508 = vmatpush1.bf16.xpose.msra.mxu0 0
        %1509 = vmatprep.subr.bf16.mxu0 0
        %1510 = vmatpush1.bf16.xpose.msra.mxu0 0
        %1511 = vmatprep.subr.bf16.mxu0 0
        %1512 = vmatpush1.bf16.xpose.msra.mxu0 0
        %1513 = vmatprep.subr.bf16.mxu0 0
        %1514 = vmatpush1.bf16.xpose.msra.mxu0 0
        %1515 = vmatprep.subr.bf16.mxu0 0
        %1516 = vmatpush1.bf16.xpose.msra.mxu0 %v1499
        %1517 = vmatprep.subr.bf16.mxu0 0
        %1518 = vmatpush2.bf16.xpose.msra.mxu0 0
        %1519 = vmatprep.subr.bf16.mxu0 0
        %1520 = vmatpush2.bf16.xpose.msra.mxu0 0
        %1521 = vmatprep.subr.bf16.mxu0 0
        %1522 = vmatpush2.bf16.xpose.msra.mxu0 0
        %1523 = vmatprep.subr.bf16.mxu0 0
        %1524 = vmatpush2.bf16.xpose.msra.mxu0 0
        %1525 = vmatprep.subr.bf16.mxu0 0
        %1526 = vmatpush2.bf16.xpose.msra.mxu0 0
        %1527 = vmatprep.subr.bf16.mxu0 0
        %1528 = vmatpush2.bf16.xpose.msra.mxu0 0
        %1529 = vmatprep.subr.bf16.mxu0 0
        %1530 = vmatpush2.bf16.xpose.msra.mxu0 0
        %1531 = vmatprep.subr.bf16.mxu0 0
        %1532 = vmatpush2.bf16.xpose.msra.mxu0 0
        %1533 = vmatprep.mubr.bf16.mxu0 0
        %1534 = vmatmul.mubr.bf16.gmra.mxu0 %v1496
        %v1535 = vpop.f32.mrf.mxu0
        %v1536 = vadd.f32 0.0, %v1535
        %v1537 = vpop.f32.mrf.mxu0
        %v1538 = vpop.f32.mrf.mxu0
        %v1539 = vpop.f32.mrf.mxu0
        %1540 = vdwg.mxu0
        %v1542 = vsel %vm1494, %v1215, 0
        %v1545 = vsel %vm1494, %v1354, 0
        %1547 = vmatprep.subr.bf16.mxu0 0
        %1548 = vmatpush1.bf16.xpose.msra.mxu0 0
        %1549 = vmatprep.subr.bf16.mxu0 0
        %1550 = vmatpush1.bf16.xpose.msra.mxu0 0
        %1551 = vmatprep.subr.bf16.mxu0 0
        %1552 = vmatpush1.bf16.xpose.msra.mxu0 0
        %1553 = vmatprep.subr.bf16.mxu0 0
        %1554 = vmatpush1.bf16.xpose.msra.mxu0 0
        %1555 = vmatprep.subr.bf16.mxu0 0
        %1556 = vmatpush1.bf16.xpose.msra.mxu0 0
        %1557 = vmatprep.subr.bf16.mxu0 0
        %1558 = vmatpush1.bf16.xpose.msra.mxu0 0
        %1559 = vmatprep.subr.bf16.mxu0 0
        %1560 = vmatpush1.bf16.xpose.msra.mxu0 0
        %1561 = vmatprep.subr.bf16.mxu0 0
        %1562 = vmatpush1.bf16.xpose.msra.mxu0 %v1545
        %1563 = vmatprep.subr.bf16.mxu0 0
        %1564 = vmatpush2.bf16.xpose.msra.mxu0 0
        %1565 = vmatprep.subr.bf16.mxu0 0
        %1566 = vmatpush2.bf16.xpose.msra.mxu0 0
        %1567 = vmatprep.subr.bf16.mxu0 0
        %1568 = vmatpush2.bf16.xpose.msra.mxu0 0
        %1569 = vmatprep.subr.bf16.mxu0 0
        %1570 = vmatpush2.bf16.xpose.msra.mxu0 0
        %1571 = vmatprep.subr.bf16.mxu0 0
        %1572 = vmatpush2.bf16.xpose.msra.mxu0 0
        %1573 = vmatprep.subr.bf16.mxu0 0
        %1574 = vmatpush2.bf16.xpose.msra.mxu0 0
        %1575 = vmatprep.subr.bf16.mxu0 0
        %1576 = vmatpush2.bf16.xpose.msra.mxu0 0
        %1577 = vmatprep.subr.bf16.mxu0 0
        %1578 = vmatpush2.bf16.xpose.msra.mxu0 0
        %1579 = vmatprep.mubr.bf16.mxu0 0
        %1580 = vmatmul.mubr.bf16.gmra.mxu0 %v1542
        %v1581 = vpop.f32.mrf.mxu0
        %v1582 = vadd.f32 0.0, %v1581
        %v1583 = vpop.f32.mrf.mxu0
        %v1584 = vpop.f32.mrf.mxu0
        %v1585 = vpop.f32.mrf.mxu0
        %1586 = vdwg.mxu0
        %v1587 = vmul.f32 %v1536, 0.25
        %v1588 = vmul.f32 %v1582, 0.25
        %v1589 = vadd.f32 %v1587, %v844
        %v1590 = vadd.f32 %v1588, %v844
        %vm1591 = vcmask 64512
        %v1592 = vsel %vm1591, %v1589, -inf
        %1593 = vmax.xlane.f32.xlu0 %v1592
        %v1594 = vpop.xlane.xlu0 %1593
        %v1595 = vsel %vm1591, %v1590, -inf
        %1596 = vmax.xlane.f32.xlu0 %v1595
        %v1597 = vpop.xlane.xlu0 %1596
        %v1598 = vsub.f32 %v1589, %v1594
        %v1599 = vsub.f32 %v1590, %v1597
        %v1600 = vmul.f32 %v1598, 1.442695
        %v1601 = vpow.pop %v1600
        %v1602 = vmul.f32 %v1599, 1.442695
        %v1603 = vpow.pop %v1602
        %v1604 = vsel %vm1591, %v1601, 0.0
        %1605 = vadd.xlane.f32.xlu0 %v1604
        %v1606 = vpop.xlane.xlu0 %1605
        %v1607 = vsel %vm1591, %v1603, 0.0
        %1608 = vadd.xlane.f32.xlu0 %v1607
        %v1609 = vpop.xlane.xlu0 %1608
        %v1610 = vrcp.pop %v1606
        %v1611 = vrcp.pop %v1609
        %v1612 = vmul.f32 %v1601, %v1610
        %v1613 = vmul.f32 %v1603, %v1611
        %v1614 = vpack.c.bf16 %v1612, %v1612
        %v1615 = vpack.c.bf16 %v1613, %v1613
        %vm1616 = vcmask 60416
        %1617 = vst.msk [vmem:[%s820] sm:$0xf] %vm1616, %v1614
        %1618 = vst.msk [vmem:[%s820 + $0x4] sm:$0xf] %vm1616, %v1615
        %v1620 = vsel %vm1591, %v1614, 0
        %vm1622 = vcmask 1043456
        %v1624 = vsel %vm1622, %v1490, 0
        %1626 = vmatprep.subr.bf16.mxu0 0
        %1627 = vmatpush1.bf16.msra.mxu0 0
        %1628 = vmatprep.subr.bf16.mxu0 0
        %1629 = vmatpush1.bf16.msra.mxu0 0
        %1630 = vmatprep.subr.bf16.mxu0 0
        %1631 = vmatpush1.bf16.msra.mxu0 0
        %1632 = vmatprep.subr.bf16.mxu0 0
        %1633 = vmatpush1.bf16.msra.mxu0 0
        %1634 = vmatprep.subr.bf16.mxu0 0
        %1635 = vmatpush1.bf16.msra.mxu0 0
        %1636 = vmatprep.subr.bf16.mxu0 0
        %1637 = vmatpush1.bf16.msra.mxu0 0
        %1638 = vmatprep.subr.bf16.mxu0 0
        %1639 = vmatpush1.bf16.msra.mxu0 0
        %1640 = vmatprep.subr.bf16.mxu0 0
        %1641 = vmatpush1.bf16.msra.mxu0 %v1624
        %1642 = vmatprep.subr.bf16.mxu0 0
        %1643 = vmatpush2.bf16.msra.mxu0 0
        %1644 = vmatprep.subr.bf16.mxu0 0
        %1645 = vmatpush2.bf16.msra.mxu0 0
        %1646 = vmatprep.subr.bf16.mxu0 0
        %1647 = vmatpush2.bf16.msra.mxu0 0
        %1648 = vmatprep.subr.bf16.mxu0 0
        %1649 = vmatpush2.bf16.msra.mxu0 0
        %1650 = vmatprep.subr.bf16.mxu0 0
        %1651 = vmatpush2.bf16.msra.mxu0 0
        %1652 = vmatprep.subr.bf16.mxu0 0
        %1653 = vmatpush2.bf16.msra.mxu0 0
        %1654 = vmatprep.subr.bf16.mxu0 0
        %1655 = vmatpush2.bf16.msra.mxu0 0
        %1656 = vmatprep.subr.bf16.mxu0 0
        %1657 = vmatpush2.bf16.msra.mxu0 0
        %1658 = vmatprep.mubr.bf16.mxu0 0
        %1659 = vmatmul.mubr.bf16.gmra.mxu0 %v1620
        %v1660 = vpop.f32.mrf.mxu0
        %v1661 = vadd.f32 0.0, %v1660
        %v1662 = vpop.f32.mrf.mxu0
        %v1663 = vpop.f32.mrf.mxu0
        %v1664 = vpop.f32.mrf.mxu0
        %1665 = vdwg.mxu0
        %v1667 = vsel %vm1591, %v1615, 0
        %v1670 = vsel %vm1622, %v1493, 0
        %1672 = vmatprep.subr.bf16.mxu0 0
        %1673 = vmatpush1.bf16.msra.mxu0 0
        %1674 = vmatprep.subr.bf16.mxu0 0
        %1675 = vmatpush1.bf16.msra.mxu0 0
        %1676 = vmatprep.subr.bf16.mxu0 0
        %1677 = vmatpush1.bf16.msra.mxu0 0
        %1678 = vmatprep.subr.bf16.mxu0 0
        %1679 = vmatpush1.bf16.msra.mxu0 0
        %1680 = vmatprep.subr.bf16.mxu0 0
        %1681 = vmatpush1.bf16.msra.mxu0 0
        %1682 = vmatprep.subr.bf16.mxu0 0
        %1683 = vmatpush1.bf16.msra.mxu0 0
        %1684 = vmatprep.subr.bf16.mxu0 0
        %1685 = vmatpush1.bf16.msra.mxu0 0
        %1686 = vmatprep.subr.bf16.mxu0 0
        %1687 = vmatpush1.bf16.msra.mxu0 %v1670
        %1688 = vmatprep.subr.bf16.mxu0 0
        %1689 = vmatpush2.bf16.msra.mxu0 0
        %1690 = vmatprep.subr.bf16.mxu0 0
        %1691 = vmatpush2.bf16.msra.mxu0 0
        %1692 = vmatprep.subr.bf16.mxu0 0
        %1693 = vmatpush2.bf16.msra.mxu0 0
        %1694 = vmatprep.subr.bf16.mxu0 0
        %1695 = vmatpush2.bf16.msra.mxu0 0
        %1696 = vmatprep.subr.bf16.mxu0 0
        %1697 = vmatpush2.bf16.msra.mxu0 0
        %1698 = vmatprep.subr.bf16.mxu0 0
        %1699 = vmatpush2.bf16.msra.mxu0 0
        %1700 = vmatprep.subr.bf16.mxu0 0
        %1701 = vmatpush2.bf16.msra.mxu0 0
        %1702 = vmatprep.subr.bf16.mxu0 0
        %1703 = vmatpush2.bf16.msra.mxu0 0
        %1704 = vmatprep.mubr.bf16.mxu0 0
        %1705 = vmatmul.mubr.bf16.gmra.mxu0 %v1667
        %v1706 = vpop.f32.mrf.mxu0
        %v1707 = vadd.f32 0.0, %v1706
        %v1708 = vpop.f32.mrf.mxu0
        %v1709 = vpop.f32.mrf.mxu0
        %v1710 = vpop.f32.mrf.mxu0
        %1711 = vdwg.mxu0
        %v1712 = vcombine.high %v1661, 0.0
        %v1714 = vunpack.c.l.s4 1983009808
        %v1715 = vunpack.c.0.s8 %v1714
        %v1716 = vlaneseq
        %v1717 = vshrl.u32 %v1716, 7
        %v1718 = vsub.s32 %v1715, %v1717
        %v1719 = vrot.slane %v1661, %v1718
        %v1721 = vunpack.c.l.s4 1983009808
        %v1722 = vunpack.c.0.s8 %v1721
        %v1723 = vlaneseq
        %v1724 = vshrl.u32 %v1723, 7
        %v1725 = vsub.s32 %v1722, %v1724
        %v1726 = vrot.slane %v1712, %v1725
        %v1727 = vcombine.high %v1707, 0.0
        %v1729 = vunpack.c.l.s4 1983009808
        %v1730 = vunpack.c.0.s8 %v1729
        %v1731 = vlaneseq
        %v1732 = vshrl.u32 %v1731, 7
        %v1733 = vsub.s32 %v1730, %v1732
        %v1734 = vrot.slane %v1707, %v1733
        %v1736 = vunpack.c.l.s4 1983009808
        %v1737 = vunpack.c.0.s8 %v1736
        %v1738 = vlaneseq
        %v1739 = vshrl.u32 %v1738, 7
        %v1740 = vsub.s32 %v1737, %v1739
        %v1741 = vrot.slane %v1727, %v1740
        %v1742 = vcombine.low %v1719, %v1734
        %v1743 = vcombine.high %v1719, %v1734
        %v1745 = vunpack.c.l.s4 1934713408
        %v1746 = vunpack.c.0.s8 %v1745
        %v1747 = vlaneseq
        %v1748 = vshrl.u32 %v1747, 7
        %v1749 = vsub.s32 %v1746, %v1748
        %v1750 = vrot.slane %v1742, %v1749
        %v1752 = vunpack.c.l.s4 1934713408
        %v1753 = vunpack.c.0.s8 %v1752
        %v1754 = vlaneseq
        %v1755 = vshrl.u32 %v1754, 7
        %v1756 = vsub.s32 %v1753, %v1755
        %v1757 = vrot.slane %v1743, %v1756
        %v1758 = vcombine.low %v1726, %v1741
        %v1759 = vcombine.high %v1726, %v1741
        %v1761 = vunpack.c.l.s4 1934713408
        %v1762 = vunpack.c.0.s8 %v1761
        %v1763 = vlaneseq
        %v1764 = vshrl.u32 %v1763, 7
        %v1765 = vsub.s32 %v1762, %v1764
        %v1766 = vrot.slane %v1758, %v1765
        %v1768 = vunpack.c.l.s4 1934713408
        %v1769 = vunpack.c.0.s8 %v1768
        %v1770 = vlaneseq
        %v1771 = vshrl.u32 %v1770, 7
        %v1772 = vsub.s32 %v1769, %v1771
        %v1773 = vrot.slane %v1759, %v1772
        %v1774 = vcombine.high %v1750, 0.0
        %v1775 = vcombine.high %v1757, 0.0
        %v1776 = vcombine.high %v1766, 0.0
        %v1777 = vcombine.high %v1773, 0.0
        %v1778 = vcombine.low %v1750, %v1757
        %v1780 = vunpack.c.l.s4 1983009808
        %v1781 = vunpack.c.0.s8 %v1780
        %v1782 = vlaneseq
        %v1783 = vshrl.u32 %v1782, 7
        %v1784 = vsub.s32 %v1781, %v1783
        %v1785 = vrot.slane %v1778, %v1784
        %v1786 = vcombine.low %v1774, %v1775
        %v1788 = vunpack.c.l.s4 1983009808
        %v1789 = vunpack.c.0.s8 %v1788
        %v1790 = vlaneseq
        %v1791 = vshrl.u32 %v1790, 7
        %v1792 = vsub.s32 %v1789, %v1791
        %v1793 = vrot.slane %v1786, %v1792
        %v1794 = vcombine.low %v1766, %v1773
        %v1796 = vunpack.c.l.s4 1983009808
        %v1797 = vunpack.c.0.s8 %v1796
        %v1798 = vlaneseq
        %v1799 = vshrl.u32 %v1798, 7
        %v1800 = vsub.s32 %v1797, %v1799
        %v1801 = vrot.slane %v1794, %v1800
        %v1802 = vcombine.low %v1776, %v1777
        %v1804 = vunpack.c.l.s4 1983009808
        %v1805 = vunpack.c.0.s8 %v1804
        %v1806 = vlaneseq
        %v1807 = vshrl.u32 %v1806, 7
        %v1808 = vsub.s32 %v1805, %v1807
        %v1809 = vrot.slane %v1802, %v1808
        %v1810 = vcombine.low %v1785, %v1793
        %v1812 = vunpack.c.l.s4 1934713408
        %v1813 = vunpack.c.0.s8 %v1812
        %v1814 = vlaneseq
        %v1815 = vshrl.u32 %v1814, 7
        %v1816 = vsub.s32 %v1813, %v1815
        %v1817 = vrot.slane %v1810, %v1816
        %v1818 = vcombine.low %v1801, %v1809
        %v1820 = vunpack.c.l.s4 1934713408
        %v1821 = vunpack.c.0.s8 %v1820
        %v1822 = vlaneseq
        %v1823 = vshrl.u32 %v1822, 7
        %v1824 = vsub.s32 %v1821, %v1823
        %v1825 = vrot.slane %v1818, %v1824
        %v1826 = vcombine.low %v1817, %v1825
        %v1827 = vcombine.high %v1817, %v1825
        %1829 = vrot.lane.b32.xlu0 %v1827, 32
        %v1830 = vpop.permute.xlu0 %1829
        %v1832 = vsel %vm849, %v1826, %v1830
        %v1833 = vpack.c.bf16 %v1832, %v1832
        %v1834 = vld [vmem:[%s11] sm:$0xf]
        %v1835 = vld [vmem:[%s11 + $0x4] sm:$0xf]
        %v1836 = vld [vmem:[%s11 + $0x8] sm:$0xf]
        %v1837 = vld [vmem:[%s11 + $0xc] sm:$0xf]
        %v1838 = vld [vmem:[%s11 + $0x10] sm:$0xf]
        %v1839 = vld [vmem:[%s11 + $0x14] sm:$0xf]
        %v1840 = vld [vmem:[%s11 + $0x18] sm:$0xf]
        %v1841 = vld [vmem:[%s11 + $0x1c] sm:$0xf]
        %v1842 = vld [vmem:[%s12] sm:$0x1]
        %v1844 = vlaneseq
        %v1845 = vshrl.u32 %v1844, 7
        %v1846 = vsub.s32 0, %v1845
        %v1847 = vrot.slane %v1842, %v1846
        %v1857 = vunpack.c.l.b16 %v1834
        %v1858 = vunpack.c.l.b16 %v1835
        %v1859 = vunpack.c.l.b16 %v1836
        %v1860 = vunpack.c.l.b16 %v1837
        %v1861 = vunpack.c.l.b16 %v1838
        %v1862 = vunpack.c.l.b16 %v1839
        %v1863 = vunpack.c.l.b16 %v1840
        %v1864 = vunpack.c.l.b16 %v1841
        %v1865 = vpack.c.b16 %v1858, %v1857
        %v1866 = vpack.c.b16 %v1860, %v1859
        %v1867 = vpack.c.b16 %v1862, %v1861
        %v1868 = vpack.c.b16 %v1864, %v1863
        %vm1873 = vcmask 523264
        %v1875 = vsel %vm1873, %v1833, 0
        %1877 = vmatprep.subr.bf16.mxu0 0
        %1878 = vmatpush1.bf16.msra.mxu0 0
        %1879 = vmatprep.subr.bf16.mxu0 0
        %1880 = vmatpush1.bf16.msra.mxu0 0
        %1881 = vmatprep.subr.bf16.mxu0 0
        %1882 = vmatpush1.bf16.msra.mxu0 0
        %1883 = vmatprep.subr.bf16.mxu0 0
        %1884 = vmatpush1.bf16.msra.mxu0 0
        %1885 = vmatprep.subr.bf16.mxu0 0
        %1886 = vmatpush1.bf16.msra.mxu0 %v1868
        %1887 = vmatprep.subr.bf16.mxu0 0
        %1888 = vmatpush1.bf16.msra.mxu0 %v1867
        %1889 = vmatprep.subr.bf16.mxu0 0
        %1890 = vmatpush1.bf16.msra.mxu0 %v1866
        %1891 = vmatprep.subr.bf16.mxu0 0
        %1892 = vmatpush1.bf16.msra.mxu0 %v1865
        %1893 = vmatprep.subr.bf16.mxu0 0
        %1894 = vmatpush2.bf16.msra.mxu0 0
        %1895 = vmatprep.subr.bf16.mxu0 0
        %1896 = vmatpush2.bf16.msra.mxu0 0
        %1897 = vmatprep.subr.bf16.mxu0 0
        %1898 = vmatpush2.bf16.msra.mxu0 0
        %1899 = vmatprep.subr.bf16.mxu0 0
        %1900 = vmatpush2.bf16.msra.mxu0 0
        %1901 = vmatprep.subr.bf16.mxu0 0
        %1902 = vmatpush2.bf16.msra.mxu0 0
        %1903 = vmatprep.subr.bf16.mxu0 0
        %1904 = vmatpush2.bf16.msra.mxu0 0
        %1905 = vmatprep.subr.bf16.mxu0 0
        %1906 = vmatpush2.bf16.msra.mxu0 0
        %1907 = vmatprep.subr.bf16.mxu0 0
        %1908 = vmatpush2.bf16.msra.mxu0 0
        %1909 = vmatprep.mubr.bf16.mxu0 0
        %1910 = vmatmul.mubr.bf16.gmra.mxu0 %v1875
        %v1911 = vpop.f32.mrf.mxu0
        %v1912 = vadd.f32 %v1847, %v1911
        %v1913 = vpop.f32.mrf.mxu0
        %v1914 = vpop.f32.mrf.mxu0
        %v1915 = vpop.f32.mrf.mxu0
        %1916 = vdwg.mxu0
        %v1917 = vadd.f32 %v1912, %v840
        %v1918 = vld [vmem:[%s19] sm:$0x1]
        %v1919 = vld [vmem:[%s20] sm:$0x1]
        %v1920 = vsel %vm849, %v1917, 0.0
        %1921 = vadd.xlane.f32.xlu0 %v1920
        %v1922 = vpop.xlane.xlu0 %1921
        %v1923 = vmul.f32 %v1922, %v853
        %v1924 = vsub.f32 %v1917, %v1923
        %v1925 = vmul.f32 %v1924, %v1924
        %v1926 = vsel %vm849, %v1925, 0.0
        %1927 = vadd.xlane.f32.xlu0 %v1926
        %v1928 = vpop.xlane.xlu0 %1927
        %v1929 = vmul.f32 %v1928, %v853
        %v1930 = vadd.f32 %v1929, 1e-06
        %v1931 = vrsqrt.pop %v1930
        %v1932 = vmul.f32 %v1924, %v1931
        %v1934 = vlaneseq
        %v1935 = vshrl.u32 %v1934, 7
        %v1936 = vsub.s32 0, %v1935
        %v1937 = vrot.slane %v1918, %v1936
        %v1939 = vmul.f32 %v1932, %v1937
        %v1941 = vlaneseq
        %v1942 = vshrl.u32 %v1941, 7
        %v1943 = vsub.s32 0, %v1942
        %v1944 = vrot.slane %v1919, %v1943
        %v1946 = vadd.f32 %v1939, %v1944
        %v1947 = vpack.c.bf16 %v1946, %v1946
        %v1948 = vld [vmem:[%s15] sm:$0xf]
        %v1949 = vld [vmem:[%s15 + $0x4] sm:$0xf]
        %v1950 = vld [vmem:[%s15 + $0x8] sm:$0xf]
        %v1951 = vld [vmem:[%s15 + $0xc] sm:$0xf]
        %v1952 = vld [vmem:[%s16] sm:$0x1]
        %v1954 = vlaneseq
        %v1955 = vshrl.u32 %v1954, 7
        %v1956 = vsub.s32 0, %v1955
        %v1957 = vrot.slane %v1952, %v1956
        %v1963 = vunpack.c.l.b16 %v1948
        %v1964 = vunpack.c.l.b16 %v1949
        %v1965 = vunpack.c.l.b16 %v1950
        %v1966 = vunpack.c.l.b16 %v1951
        %v1967 = vpack.c.b16 %v1964, %v1963
        %v1968 = vpack.c.b16 %v1966, %v1965
        %v1972 = vsel %vm849, %v1947, 0
        %1974 = vmatprep.subr.bf16.mxu0 0
        %1975 = vmatpush1.bf16.msra.mxu0 0
        %1976 = vmatprep.subr.bf16.mxu0 0
        %1977 = vmatpush1.bf16.msra.mxu0 0
        %1978 = vmatprep.subr.bf16.mxu0 0
        %1979 = vmatpush1.bf16.msra.mxu0 0
        %1980 = vmatprep.subr.bf16.mxu0 0
        %1981 = vmatpush1.bf16.msra.mxu0 0
        %1982 = vmatprep.subr.bf16.mxu0 0
        %1983 = vmatpush1.bf16.msra.mxu0 0
        %1984 = vmatprep.subr.bf16.mxu0 0
        %1985 = vmatpush1.bf16.msra.mxu0 0
        %1986 = vmatprep.subr.bf16.mxu0 0
        %1987 = vmatpush1.bf16.msra.mxu0 %v1968
        %1988 = vmatprep.subr.bf16.mxu0 0
        %1989 = vmatpush1.bf16.msra.mxu0 %v1967
        %1990 = vmatprep.subr.bf16.mxu0 0
        %1991 = vmatpush2.bf16.msra.mxu0 0
        %1992 = vmatprep.subr.bf16.mxu0 0
        %1993 = vmatpush2.bf16.msra.mxu0 0
        %1994 = vmatprep.subr.bf16.mxu0 0
        %1995 = vmatpush2.bf16.msra.mxu0 0
        %1996 = vmatprep.subr.bf16.mxu0 0
        %1997 = vmatpush2.bf16.msra.mxu0 0
        %1998 = vmatprep.subr.bf16.mxu0 0
        %1999 = vmatpush2.bf16.msra.mxu0 0
        %2000 = vmatprep.subr.bf16.mxu0 0
        %2001 = vmatpush2.bf16.msra.mxu0 0
        %2002 = vmatprep.subr.bf16.mxu0 0
        %2003 = vmatpush2.bf16.msra.mxu0 0
        %2004 = vmatprep.subr.bf16.mxu0 0
        %2005 = vmatpush2.bf16.msra.mxu0 0
        %2006 = vmatprep.mubr.bf16.mxu0 0
        %2007 = vmatmul.mubr.bf16.gmra.mxu0 %v1972
        %v2008 = vpop.f32.mrf.mxu0
        %v2009 = vadd.f32 %v1957, %v2008
        %v2010 = vpop.f32.mrf.mxu0
        %v2011 = vpop.f32.mrf.mxu0
        %v2012 = vpop.f32.mrf.mxu0
        %2013 = vdwg.mxu0
        %v2014 = vmax.f32 %v2009, 0.0
        %v2015 = vpack.c.bf16 %v2014, %v2014
        %v2016 = vld [vmem:[%s17] sm:$0xf]
        %v2017 = vld [vmem:[%s17 + $0x4] sm:$0xf]
        %v2018 = vld [vmem:[%s17 + $0x8] sm:$0xf]
        %v2019 = vld [vmem:[%s17 + $0xc] sm:$0xf]
        %v2020 = vld [vmem:[%s17 + $0x10] sm:$0xf]
        %v2021 = vld [vmem:[%s17 + $0x14] sm:$0xf]
        %v2022 = vld [vmem:[%s17 + $0x18] sm:$0xf]
        %v2023 = vld [vmem:[%s17 + $0x1c] sm:$0xf]
        %v2024 = vld [vmem:[%s18] sm:$0x1]
        %v2026 = vlaneseq
        %v2027 = vshrl.u32 %v2026, 7
        %v2028 = vsub.s32 0, %v2027
        %v2029 = vrot.slane %v2024, %v2028
        %v2039 = vunpack.c.l.b16 %v2016
        %v2040 = vunpack.c.l.b16 %v2017
        %v2041 = vunpack.c.l.b16 %v2018
        %v2042 = vunpack.c.l.b16 %v2019
        %v2043 = vunpack.c.l.b16 %v2020
        %v2044 = vunpack.c.l.b16 %v2021
        %v2045 = vunpack.c.l.b16 %v2022
        %v2046 = vunpack.c.l.b16 %v2023
        %v2047 = vpack.c.b16 %v2040, %v2039
        %v2048 = vpack.c.b16 %v2042, %v2041
        %v2049 = vpack.c.b16 %v2044, %v2043
        %v2050 = vpack.c.b16 %v2046, %v2045
        %v2056 = vsel %vm1873, %v2015, 0
        %2058 = vmatprep.subr.bf16.mxu0 0
        %2059 = vmatpush1.bf16.msra.mxu0 0
        %2060 = vmatprep.subr.bf16.mxu0 0
        %2061 = vmatpush1.bf16.msra.mxu0 0
        %2062 = vmatprep.subr.bf16.mxu0 0
        %2063 = vmatpush1.bf16.msra.mxu0 0
        %2064 = vmatprep.subr.bf16.mxu0 0
        %2065 = vmatpush1.bf16.msra.mxu0 0
        %2066 = vmatprep.subr.bf16.mxu0 0
        %2067 = vmatpush1.bf16.msra.mxu0 %v2050
        %2068 = vmatprep.subr.bf16.mxu0 0
        %2069 = vmatpush1.bf16.msra.mxu0 %v2049
        %2070 = vmatprep.subr.bf16.mxu0 0
        %2071 = vmatpush1.bf16.msra.mxu0 %v2048
        %2072 = vmatprep.subr.bf16.mxu0 0
        %2073 = vmatpush1.bf16.msra.mxu0 %v2047
        %2074 = vmatprep.subr.bf16.mxu0 0
        %2075 = vmatpush2.bf16.msra.mxu0 0
        %2076 = vmatprep.subr.bf16.mxu0 0
        %2077 = vmatpush2.bf16.msra.mxu0 0
        %2078 = vmatprep.subr.bf16.mxu0 0
        %2079 = vmatpush2.bf16.msra.mxu0 0
        %2080 = vmatprep.subr.bf16.mxu0 0
        %2081 = vmatpush2.bf16.msra.mxu0 0
        %2082 = vmatprep.subr.bf16.mxu0 0
        %2083 = vmatpush2.bf16.msra.mxu0 0
        %2084 = vmatprep.subr.bf16.mxu0 0
        %2085 = vmatpush2.bf16.msra.mxu0 0
        %2086 = vmatprep.subr.bf16.mxu0 0
        %2087 = vmatpush2.bf16.msra.mxu0 0
        %2088 = vmatprep.subr.bf16.mxu0 0
        %2089 = vmatpush2.bf16.msra.mxu0 0
        %2090 = vmatprep.mubr.bf16.mxu0 0
        %2091 = vmatmul.mubr.bf16.gmra.mxu0 %v2056
        %v2092 = vpop.f32.mrf.mxu0
        %v2093 = vadd.f32 %v2029, %v2092
        %v2094 = vpop.f32.mrf.mxu0
        %v2095 = vpop.f32.mrf.mxu0
        %v2096 = vpop.f32.mrf.mxu0
        %2097 = vdwg.mxu0
        %v2098 = vadd.f32 %v2093, %v1917
        %2100 = vset.pattern.permute.xlu0 0
        %2101 = vperm.xlu0 %2100, %v846
        %v2102 = vpop.permute.xlu0 %2101
        %v2104 = vmul.f32 %v2098, %v2102
        %2105 = vst.msk [vmem:[%s813] sm:$0xff] %vm849, %v2104
        %s2106 = sand.u32 %s540, 1
        %s2107 = scalar_lea.sflag [#allocation4], %s2106
        %s2108 = sand.u32 %s540, 1
        %s2109 = smul.addr %s2108, 8
        %s2110 = scalar_lea.vmem [#allocation7], %s2109
        %s2111 = sand.u32 %s568, 1
        %s2112 = scalar_lea.sflag [#allocation9], %s2111
        %s2113 = sand.u32 %s568, 1
        %s2114 = smul.addr %s2113, 8
        %s2115 = scalar_lea.vmem [#allocation8], %s2114
        // Predicated region
        $region113: #{tpu_custom_call.1} parent=103 // pred_check
          %p2116 = pneg %p550
        $region114: #{tpu_custom_call.1} parent=103 // pred_check_branch
          %2118 = sbr.rel (%p2116) target = $region116
        $region115: #{tpu_custom_call.1} parent=103 // pred_region
          %s2120 = ssub.s32 128, 128
          %2121 = vsyncadd %s2107, %s2120
          %s2122 = sadd.s32 %s51, %s50
          %s2123 = smul.addr %s2122, 128
          %s2124 = scalar_lea.hbm %s21, %s2123
          %s2126 = sshll.u32 %s2110, 4
          %s2127 = int_to_ptr.vmem [resolvable:$true] %s2126
          %2129 = dma.vmem_to_hbm [thread:$0]  %s2127, 128, %s2124, %s2107
        $region116: #{tpu_custom_call.1} parent=103 // pred_fallthru
          _
        // Predicated region
        $region117: #{tpu_custom_call.1} parent=103 // pred_check
          %p2130 = pneg %p578
        $region118: #{tpu_custom_call.1} parent=103 // pred_check_branch
          %2132 = sbr.rel (%p2130) target = $region120
        $region119: #{tpu_custom_call.1} parent=103 // pred_region
          %s2134 = ssub.s32 128, 128
          %2135 = vsyncadd %s2112, %s2134
          %s2136 = smul.addr %s50, 2
          %s2137 = sadd.s32 %s51, %s2136
          %s2138 = smul.addr %s2137, 64
          %s2139 = scalar_lea.hbm %s22, %s2138
          %s2140 = sshll.u32 %s2115, 4
          %s2141 = int_to_ptr.vmem [resolvable:$true] %s2140
          %2146 = dma.vmem_to_hbm [thread:$0]  %s2141, 128, %s2139, %s2112, 64, 64, 4
        $region120: #{tpu_custom_call.1} parent=103 // pred_fallthru
          _
      $region104: #{tpu_custom_call.1} parent=5 // pred_fallthru
        _
      %p2147 = scmp.le.s32.totalorder 2, %s41
      // Predicated region
      $region121: #{tpu_custom_call.1} parent=5 // pred_check
        %p2148 = pneg %p2147
      $region122: #{tpu_custom_call.1} parent=5 // pred_check_branch
        %2150 = sbr.rel (%p2148) target = $region124
      $region123: #{tpu_custom_call.1} parent=5 // pred_region
        %s2151 = ssub.s32 %s41, 2
        // Predicated region
        $region125: #{tpu_custom_call.1} parent=123 // pred_check
          %p2152 = pneg %p556
        $region126: #{tpu_custom_call.1} parent=123 // pred_check_branch
          %2154 = sbr.rel (%p2152) target = $region128
        $region127: #{tpu_custom_call.1} parent=123 // pred_region
          %s2155 = sand.u32 %s541, 1
          %s2156 = scalar_lea.sflag [#allocation4], %s2155
          %s2157 = sand.u32 %s541, 1
          %s2158 = smul.addr %s2157, 8
          %s2159 = scalar_lea.vmem [#allocation7], %s2158
          %2160 = dma.done %s2156, 128
        $region128: #{tpu_custom_call.1} parent=123 // pred_fallthru
          _
        // Predicated region
        $region129: #{tpu_custom_call.1} parent=123 // pred_check
          %p2161 = pneg %p584
        $region130: #{tpu_custom_call.1} parent=123 // pred_check_branch
          %2163 = sbr.rel (%p2161) target = $region132
        $region131: #{tpu_custom_call.1} parent=123 // pred_region
          %s2164 = sand.u32 %s569, 1
          %s2165 = scalar_lea.sflag [#allocation9], %s2164
          %s2166 = sand.u32 %s569, 1
          %s2167 = smul.addr %s2166, 8
          %s2168 = scalar_lea.vmem [#allocation8], %s2167
          %2169 = dma.done %s2165, 128
        $region132: #{tpu_custom_call.1} parent=123 // pred_fallthru
          _
      $region124: #{tpu_custom_call.1} parent=5 // pred_fallthru
        _
    $region6: #{tpu_custom_call.1} parent=1 // loop_footer
      %s45 = sadd.s32 1, %s41
    $region7: #{tpu_custom_call.1} parent=1 // loop_footer_branch
      %40 = sbr.rel target = $region3
    $region8: #{tpu_custom_call.1} parent=1 // loop_exit
      _
    %2170 = vsyncpa [#allocation3], 1
    %s2171 = scalar_lea.sflag [#allocation3], 1
    %2172 = vsyncpa %s2171, 1
    %2173 = vsyncpa [#allocation6], 1
    %s2174 = scalar_lea.sflag [#allocation6], 1
    %2175 = vsyncpa %s2174, 1
    %2176 = vsyncpa [#allocation4], 1
    %s2177 = scalar_lea.sflag [#allocation4], 1
    %2178 = vsyncpa %s2177, 1
    %2179 = vsyncpa [#allocation9], 1
    %s2180 = scalar_lea.sflag [#allocation9], 1
    %2181 = vsyncpa %s2180, 1

</llo_original>
